<compile_context>
chip_gen: v7x
topology: tpu7x:2x2x1
jax: 0.10.0
libtpu: 0.0.40
codegen_flags: <defaults>
</compile_context>

<pallas_src>
import jax
import jax.numpy as jnp
from jax.experimental import pallas as pl
from jax.experimental.pallas import tpu as pltpu

K = 5          # conv kernel size
PAD = 1        # conv padding
BN_EPS = 1e-5
LANE = 128     # TPU lane width


def _ceil_to(v, m):
    return ((v + m - 1) // m) * m


def _pick_batch_tile(n, rows_per_image):
    """Largest batch tile that divides N, keeps <=256 accumulation rows per grid
    step, and keeps the grid length even (both v7x TensorCores busy)."""
    best = 1
    for bt in range(1, n + 1):
        if n % bt == 0 and bt * rows_per_image <= 256 and (n // bt) % 2 == 0:
            best = bt
    return best


# ---------------------------------------------------------------------------
# Wrapper-side helper: fold the (kw, cin) taps of a 5x5 conv into the matmul
# contraction dimension.  With x laid out as rows of length w_in*Cin, the 2-D
# conv (stride 1, width padding `pad`) becomes
#       out[oh] = sum_kh   x_rows[oh + kh] @ band[kh]
# where band has shape (K, w_in*Cin, w_out*Cout) and is block-banded.
# ---------------------------------------------------------------------------
def band_weights(w_hwio, w_in, w_out, pad):
    kk, _, cin, cout = w_hwio.shape
    wi = jnp.arange(w_in)                       # unpadded input column
    wo = jnp.arange(w_out)                      # output column
    kw = wi[:, None] - wo[None, :] + pad        # (w_in, w_out) tap index
    valid = (kw >= 0) & (kw < kk)
    kw_c = jnp.clip(kw, 0, kk - 1)
    g = w_hwio[:, kw_c]                         # (K, w_in, w_out, cin, cout)
    g = jnp.where(valid[None, :, :, None, None], g, 0.0)
    g = jnp.transpose(g, (0, 1, 3, 2, 4))       # (K, w_in, cin, w_out, cout)
    return g.reshape(kk, w_in * cin, w_out * cout)


# ---------------------------------------------------------------------------
# Kernel A: fused conv1 + bias + conv2 + bias (+ BN channel partials) for one
# batch tile of BT images.
#   x_ref    : (BT, H+2P, Wp*)          bf16  H-padded, lane-padded input rows
#   wb1_ref  : (K, Wp*, Wo1p*)          bf16  banded conv1 weights (lane-padded)
#   b1_ref   : (1, Wo1p*)               f32   conv1 bias tiled along Wo1
#   wb2_ref  : (K, Wo1p*, Wo2p*)        bf16  banded conv2 weights
#   b2_ref   : (1, Wo2p*)               f32   conv2 bias tiled along Wo2
#   sel_ref  : (Wo2p*, Cp)              f32   one-hot lane->channel selector
#   o_ref    : (BT, Ho2, Wo2p*)         bf16  conv2 output (lane-dense)
#   stats_ref: (1, 2, Cp)               f32   per-tile [channel sum; sum of sq]
#   mid_ref  : (BT, Ho1+2P, Wo1p*)      bf16  VMEM scratch: conv1 out + H halo
# ---------------------------------------------------------------------------
def fused_conv_kernel(x_ref, wb1_ref, b1_ref, wb2_ref, b2_ref, sel_ref,
                      o_ref, stats_ref, mid_ref):
    bt = x_ref.shape[0]
    wcin = x_ref.shape[2]
    hmid, wo1c = mid_ref.shape[1], mid_ref.shape[2]
    ho2, wo2c = o_ref.shape[1], o_ref.shape[2]
    ho1 = hmid - 2 * PAD

    # ---- conv1: K row-shifted wide matmuls (bf16 operands, f32 accumulation) --
    acc1 = jnp.zeros((bt * ho1, wo1c), jnp.float32)
    for kh in range(K):
        lhs = x_ref[:, kh:kh + ho1, :].reshape(bt * ho1, wcin)
        acc1 = acc1 + jnp.dot(lhs, wb1_ref[kh],
                              preferred_element_type=jnp.float32)
    acc1 = acc1 + b1_ref[...]                       # bias (f32)

    # Stage conv1 result in VMEM (bf16) with a zero row halo = conv2's H padding
    # (conv2's W padding is already folded into its banded weights).  Only the
    # halo rows are zeroed; the data rows are fully overwritten.
    mid_ref[:, :PAD, :] = jnp.zeros((bt, PAD, wo1c), mid_ref.dtype)
    mid_ref[:, PAD + ho1:, :] = jnp.zeros((bt, PAD, wo1c), mid_ref.dtype)
    mid_ref[:, PAD:PAD + ho1, :] = acc1.reshape(bt, ho1, wo1c).astype(mid_ref.dtype)

    # ---- conv2 ----
    acc2 = jnp.zeros((bt * ho2, wo2c), jnp.float32)
    for kh in range(K):
        lhs = mid_ref[:, kh:kh + ho2, :].reshape(bt * ho2, wo1c)
        acc2 = acc2 + jnp.dot(lhs, wb2_ref[kh],
                              preferred_element_type=jnp.float32)
    acc2 = acc2 + b2_ref[...]

    o_ref[...] = acc2.reshape(bt, ho2, wo2c).astype(o_ref.dtype)

    # ---- per-tile per-channel partials for BatchNorm (f32) ----
    # Sublane-reduce rows, then collapse the Wo lane groups to channels with a
    # one-hot selector matmul (MXU is otherwise idle here); padded lanes have
    # zero selector rows so they never pollute the real-channel statistics.
    row_sum = jnp.sum(acc2, axis=0, keepdims=True)          # (1, Wo2p*)
    row_sq = jnp.sum(acc2 * acc2, axis=0, keepdims=True)    # (1, Wo2p*)
    ch_sum = jnp.dot(row_sum, sel_ref[...], preferred_element_type=jnp.float32)
    ch_sq = jnp.dot(row_sq, sel_ref[...], preferred_element_type=jnp.float32)
    stats_ref[...] = jnp.concatenate([ch_sum, ch_sq], axis=0)[None, :, :]


def _double_conv(x_rows, wb1, b1t, wb2, b2t, sel, bt, ho1, ho2, c_pad):
    n, hp, wcin = x_rows.shape
    wo1c = wb1.shape[2]
    wo2c = wb2.shape[2]
    grid_n = n // bt
    return pl.pallas_call(
        fused_conv_kernel,
        out_shape=(
            jax.ShapeDtypeStruct((n, ho2, wo2c), jnp.bfloat16),   # conv2 output
            jax.ShapeDtypeStruct((grid_n, 2, c_pad), jnp.float32),  # BN partials
        ),
        grid_spec=pltpu.PrefetchScalarGridSpec(
            num_scalar_prefetch=0,
            grid=(grid_n,),
            in_specs=[
                pl.BlockSpec((bt, hp, wcin), lambda i: (i, 0, 0)),
                pl.BlockSpec(wb1.shape, lambda i: (0, 0, 0)),
                pl.BlockSpec(b1t.shape, lambda i: (0, 0)),
                pl.BlockSpec(wb2.shape, lambda i: (0, 0, 0)),
                pl.BlockSpec(b2t.shape, lambda i: (0, 0)),
                pl.BlockSpec(sel.shape, lambda i: (0, 0)),
            ],
            out_specs=(
                pl.BlockSpec((bt, ho2, wo2c), lambda i: (i, 0, 0)),
                pl.BlockSpec((1, 2, c_pad), lambda i: (i, 0, 0)),
            ),
            scratch_shapes=[pltpu.VMEM((bt, ho1 + 2 * PAD, wo1c), jnp.bfloat16)],
        ),
        compiler_params=pltpu.CompilerParams(
            dimension_semantics=("parallel",),   # batch tiles across v7x cores
        ),
    )(x_rows, wb1, b1t, wb2, b2t, sel)


# ---------------------------------------------------------------------------
# Kernel B: apply-only BatchNorm + ReLU on a batch tile, lane-dense layout.
#   x_ref (BT, Ho2, Wo2p*) bf16; scale/shift (1, 1, Wo2p*) f32 (already tiled).
# ---------------------------------------------------------------------------
def bn_apply_kernel(x_ref, scale_ref, shift_ref, o_ref):
    x = x_ref[...].astype(jnp.float32)
    y = x * scale_ref[...] + shift_ref[...]
    o_ref[...] = jnp.maximum(y, 0.0).astype(o_ref.dtype)


def _bn_apply(conv_out, scale_l, shift_l, bt):
    n, ho, wc = conv_out.shape
    grid_n = n // bt
    return pl.pallas_call(
        bn_apply_kernel,
        out_shape=jax.ShapeDtypeStruct((n, ho, wc), jnp.float32),
        grid_spec=pltpu.PrefetchScalarGridSpec(
            num_scalar_prefetch=0,
            grid=(grid_n,),
            in_specs=[
                pl.BlockSpec((bt, ho, wc), lambda i: (i, 0, 0)),
                pl.BlockSpec((1, 1, wc), lambda i: (0, 0, 0)),
                pl.BlockSpec((1, 1, wc), lambda i: (0, 0, 0)),
            ],
            out_specs=pl.BlockSpec((bt, ho, wc), lambda i: (i, 0, 0)),
        ),
        compiler_params=pltpu.CompilerParams(
            dimension_semantics=("parallel",),
        ),
    )(conv_out, scale_l, shift_l)


# ---------------------------------------------------------------------------
# VGGBlock forward (public API: NCHW, like PyTorch).
# ---------------------------------------------------------------------------
@jax.jit
def vgg_block_forward(x_nchw, params):
    n, cin, h, w = x_nchw.shape
    w1, b1 = params["w1"], params["b1"]            # (K,K,cin,cmid), (cmid,)
    w2, b2 = params["w2"], params["b2"]            # (K,K,cmid,cout), (cout,)
    cmid, cout = w1.shape[-1], w2.shape[-1]
    ho1, wo1 = h + 2 * PAD - K + 1, w + 2 * PAD - K + 1
    ho2, wo2 = ho1 + 2 * PAD - K + 1, wo1 + 2 * PAD - K + 1

    wcin, wo1c, wo2c = w * cin, wo1 * cmid, wo2 * cout
    wcin_p, wo1c_p, wo2c_p = (_ceil_to(v, LANE) for v in (wcin, wo1c, wo2c))
    c_p = _ceil_to(cout, LANE)

    # NCHW -> NHWC -> pad H only (W padding is folded into the banded weights)
    # -> lane-dense (H+2P, W*Cin) rows, zero-padded to 128 lanes, bf16 once.
    x = jnp.transpose(x_nchw, (0, 2, 3, 1))
    x = jnp.pad(x, ((0, 0), (PAD, PAD), (0, 0), (0, 0)))
    x = x.reshape(n, h + 2 * PAD, wcin)
    x = jnp.pad(x, ((0, 0), (0, 0), (0, wcin_p - wcin))).astype(jnp.bfloat16)

    wb1 = band_weights(w1, w, wo1, PAD)                       # (K, W*Cin, Wo1*Cmid)
    wb1 = jnp.pad(wb1, ((0, 0), (0, wcin_p - wcin),
                        (0, wo1c_p - wo1c))).astype(jnp.bfloat16)
    wb2 = band_weights(w2, wo1, wo2, PAD)                     # (K, Wo1*Cmid, Wo2*Cout)
    wb2 = jnp.pad(wb2, ((0, 0), (0, wo1c_p - wo1c),
                        (0, wo2c_p - wo2c))).astype(jnp.bfloat16)
    b1t = jnp.pad(jnp.tile(b1, wo1), (0, wo1c_p - wo1c))[None, :]   # (1, Wo1p*)
    b2t = jnp.pad(jnp.tile(b2, wo2), (0, wo2c_p - wo2c))[None, :]   # (1, Wo2p*)

    # One-hot selector collapsing the Wo2 lane groups to per-channel sums;
    # zero rows for padded lanes / zero cols for padded channels.
    lane = jnp.arange(wo2c_p)
    ch = jnp.arange(c_p)
    sel = ((lane[:, None] % cout) == ch[None, :]) \
        & (lane[:, None] < wo2c) & (ch[None, :] < cout)
    sel = sel.astype(jnp.float32)

    bt = _pick_batch_tile(n, ho2)
    conv, stats = _double_conv(x, wb1, b1t, wb2, b2t, sel, bt, ho1, ho2, c_p)

    # Combine per-tile partials, fold BN (biased batch variance) into a
    # lane-dense scale/shift.  Only the `cout` real channels are used.
    stot = jnp.sum(stats, axis=0)                      # (2, Cp)
    m = float(n * ho2 * wo2)                           # real elements per channel
    mean = stot[0, :cout] / m
    var = jnp.maximum(stot[1, :cout] / m - mean * mean, 0.0)
    inv = jax.lax.rsqrt(var + BN_EPS)
    scale = params["gamma"] * inv
    shift = params["beta"] - mean * scale
    scale_l = jnp.pad(jnp.tile(scale, wo2), (0, wo2c_p - wo2c)).reshape(1, 1, wo2c_p)
    shift_l = jnp.pad(jnp.tile(shift, wo2), (0, wo2c_p - wo2c)).reshape(1, 1, wo2c_p)

    y = _bn_apply(conv, scale_l, shift_l, bt)          # (N, Ho2, Wo2p*) f32
    y = y[:, :, :wo2c].reshape(n, ho2, wo2, cout)
    return jnp.transpose(y, (0, 3, 1, 2))              # NHWC -> NCHW


def init_params(key, in_c, mid_c, out_c):
    k1, k2, k3, k4 = jax.random.split(key, 4)
    w1 = jax.random.normal(k1, (K, K, in_c, mid_c), jnp.float32) * 0.1   # HWIO
    b1 = jax.random.normal(k2, (mid_c,), jnp.float32) * 0.01
    w2 = jax.random.normal(k3, (K, K, mid_c, out_c), jnp.float32) * 0.1  # HWIO
    b2 = jax.random.normal(k4, (out_c,), jnp.float32) * 0.01
    gamma = jnp.ones((out_c,), jnp.float32)    # PyTorch BN default weight
    beta = jnp.zeros((out_c,), jnp.float32)    # PyTorch BN default bias
    return dict(w1=w1, b1=b1, w2=w2, b2=b2, gamma=gamma, beta=beta)


def reference_forward(x_nchw, params):
    """Pure-JAX f32 reference (same training-mode BN semantics)."""
    dn = ("NHWC", "HWIO", "NHWC")
    x = jnp.transpose(x_nchw, (0, 2, 3, 1))
    o = jax.lax.conv_general_dilated(
        x, params["w1"], (1, 1), [(PAD, PAD), (PAD, PAD)], dimension_numbers=dn
    ) + params["b1"]
    o = jax.lax.conv_general_dilated(
        o, params["w2"], (1, 1), [(PAD, PAD), (PAD, PAD)], dimension_numbers=dn
    ) + params["b2"]
    mean = jnp.mean(o, axis=(0, 1, 2))
    var = jnp.mean((o - mean) ** 2, axis=(0, 1, 2))
    o = (o - mean) * jax.lax.rsqrt(var + BN_EPS) * params["gamma"] + params["beta"]
    o = jnp.maximum(o, 0.0)
    return jnp.transpose(o, (0, 3, 1, 2))


if __name__ == "__main__":
    key = jax.random.PRNGKey(0)
    kx, kp = jax.random.split(key)

    N, IN_C, MID_C, OUT_C, H, W = 2, 4, 8, 8, 16, 16
    x = jax.random.normal(kx, (N, IN_C, H, W), jnp.float32)   # NCHW like PyTorch
    params = init_params(kp, IN_C, MID_C, OUT_C)

    y = vgg_block_forward(x, params)
    jax.block_until_ready(y)

    assert y.shape == (N, OUT_C, H - 4, W - 4), y.shape
    assert bool(jnp.all(y >= 0.0))            # ReLU output is non-negative
    assert bool(jnp.all(jnp.isfinite(y)))

    # Loose tolerance: matmul operands and intermediates are bf16 (f32 accumulation).
    y_ref = reference_forward(x, params)
    err = float(jnp.max(jnp.abs(y - y_ref)))
    assert err < 0.2, f"max abs error vs f32 reference: {err}"

    print("KERNEL_OK")
</pallas_src>

<mosaic_0001>
module attributes {stable_mosaic.version = 11 : i64} {
  func.func @fused_conv_kernel(%arg0: i32, %arg1: memref<1x18x128xbf16, #tpu.memory_space<vmem>>, %arg2: memref<5x128x128xbf16, #tpu.memory_space<vmem>>, %arg3: memref<1x128xf32, #tpu.memory_space<vmem>>, %arg4: memref<5x128x128xbf16, #tpu.memory_space<vmem>>, %arg5: memref<1x128xf32, #tpu.memory_space<vmem>>, %arg6: memref<128x128xf32, #tpu.memory_space<vmem>>, %arg7: memref<1x12x128xbf16, #tpu.memory_space<vmem>>, %arg8: memref<1x2x128xf32, #tpu.memory_space<vmem>>, %arg9: memref<1x16x128xbf16, #tpu.memory_space<vmem>>) attributes {dimension_semantics = [#tpu.dimension_semantics<parallel>], iteration_bounds = array<i64: 2>, scalar_prefetch = 0 : i64, scratch_operands = 1 : i64, tpu.core_type = #tpu.core_type<tc>, window_params = [{transform_indices = @transform_0, window_bounds = array<i64: 1, 18, 128>}, {pipeline_mode = #tpu.pipeline_mode<synchronous>, transform_indices = @transform_1, window_bounds = array<i64: 5, 128, 128>}, {pipeline_mode = #tpu.pipeline_mode<synchronous>, transform_indices = @transform_2, window_bounds = array<i64: 1, 128>}, {pipeline_mode = #tpu.pipeline_mode<synchronous>, transform_indices = @transform_3, window_bounds = array<i64: 5, 128, 128>}, {pipeline_mode = #tpu.pipeline_mode<synchronous>, transform_indices = @transform_4, window_bounds = array<i64: 1, 128>}, {pipeline_mode = #tpu.pipeline_mode<synchronous>, transform_indices = @transform_5, window_bounds = array<i64: 128, 128>}, {transform_indices = @transform_6, window_bounds = array<i64: 1, 12, 128>}, {transform_indices = @transform_7, window_bounds = array<i64: 1, 2, 128>}]} {
    %cst = arith.constant 0.000000e+00 : f32
    %0 = vector.broadcast %cst : f32 to vector<14x128xf32>
    %c0 = arith.constant 0 : index
    %c0_0 = arith.constant 0 : index
    %c0_1 = arith.constant 0 : index
    %1 = vector.load %arg1[%c0, %c0_0, %c0_1] : memref<1x18x128xbf16, #tpu.memory_space<vmem>>, vector<1x14x128xbf16>
    %2 = vector.shape_cast %1 : vector<1x14x128xbf16> to vector<14x128xbf16>
    %c0_2 = arith.constant 0 : index
    %c0_3 = arith.constant 0 : index
    %c0_4 = arith.constant 0 : index
    %3 = vector.load %arg2[%c0_2, %c0_3, %c0_4] : memref<5x128x128xbf16, #tpu.memory_space<vmem>>, vector<1x128x128xbf16>
    %4 = vector.shape_cast %3 : vector<1x128x128xbf16> to vector<128x128xbf16>
    %cst_5 = arith.constant dense<0.000000e+00> : vector<14x128xf32>
    %5 = tpu.matmul %2, %4, %cst_5 {dimension_numbers = #tpu.dot_dimension_numbers<[1], [0], [0], [1], [0, 0, 1, 1], [], []>} : vector<14x128xbf16>, vector<128x128xbf16>, vector<14x128xf32> -> vector<14x128xf32>
    %6 = arith.addf %0, %5 : vector<14x128xf32>
    %c0_6 = arith.constant 0 : index
    %c1 = arith.constant 1 : index
    %c0_7 = arith.constant 0 : index
    %7 = vector.load %arg1[%c0_6, %c1, %c0_7] : memref<1x18x128xbf16, #tpu.memory_space<vmem>>, vector<1x14x128xbf16>
    %8 = vector.shape_cast %7 : vector<1x14x128xbf16> to vector<14x128xbf16>
    %c1_8 = arith.constant 1 : index
    %c0_9 = arith.constant 0 : index
    %c0_10 = arith.constant 0 : index
    %9 = vector.load %arg2[%c1_8, %c0_9, %c0_10] : memref<5x128x128xbf16, #tpu.memory_space<vmem>>, vector<1x128x128xbf16>
    %10 = vector.shape_cast %9 : vector<1x128x128xbf16> to vector<128x128xbf16>
    %cst_11 = arith.constant dense<0.000000e+00> : vector<14x128xf32>
    %11 = tpu.matmul %8, %10, %cst_11 {dimension_numbers = #tpu.dot_dimension_numbers<[1], [0], [0], [1], [0, 0, 1, 1], [], []>} : vector<14x128xbf16>, vector<128x128xbf16>, vector<14x128xf32> -> vector<14x128xf32>
    %12 = arith.addf %6, %11 : vector<14x128xf32>
    %c0_12 = arith.constant 0 : index
    %c2 = arith.constant 2 : index
    %c0_13 = arith.constant 0 : index
    %13 = vector.load %arg1[%c0_12, %c2, %c0_13] : memref<1x18x128xbf16, #tpu.memory_space<vmem>>, vector<1x14x128xbf16>
    %14 = vector.shape_cast %13 : vector<1x14x128xbf16> to vector<14x128xbf16>
    %c2_14 = arith.constant 2 : index
    %c0_15 = arith.constant 0 : index
    %c0_16 = arith.constant 0 : index
    %15 = vector.load %arg2[%c2_14, %c0_15, %c0_16] : memref<5x128x128xbf16, #tpu.memory_space<vmem>>, vector<1x128x128xbf16>
    %16 = vector.shape_cast %15 : vector<1x128x128xbf16> to vector<128x128xbf16>
    %cst_17 = arith.constant dense<0.000000e+00> : vector<14x128xf32>
    %17 = tpu.matmul %14, %16, %cst_17 {dimension_numbers = #tpu.dot_dimension_numbers<[1], [0], [0], [1], [0, 0, 1, 1], [], []>} : vector<14x128xbf16>, vector<128x128xbf16>, vector<14x128xf32> -> vector<14x128xf32>
    %18 = arith.addf %12, %17 : vector<14x128xf32>
    %c0_18 = arith.constant 0 : index
    %c3 = arith.constant 3 : index
    %c0_19 = arith.constant 0 : index
    %19 = vector.load %arg1[%c0_18, %c3, %c0_19] : memref<1x18x128xbf16, #tpu.memory_space<vmem>>, vector<1x14x128xbf16>
    %20 = vector.shape_cast %19 : vector<1x14x128xbf16> to vector<14x128xbf16>
    %c3_20 = arith.constant 3 : index
    %c0_21 = arith.constant 0 : index
    %c0_22 = arith.constant 0 : index
    %21 = vector.load %arg2[%c3_20, %c0_21, %c0_22] : memref<5x128x128xbf16, #tpu.memory_space<vmem>>, vector<1x128x128xbf16>
    %22 = vector.shape_cast %21 : vector<1x128x128xbf16> to vector<128x128xbf16>
    %cst_23 = arith.constant dense<0.000000e+00> : vector<14x128xf32>
    %23 = tpu.matmul %20, %22, %cst_23 {dimension_numbers = #tpu.dot_dimension_numbers<[1], [0], [0], [1], [0, 0, 1, 1], [], []>} : vector<14x128xbf16>, vector<128x128xbf16>, vector<14x128xf32> -> vector<14x128xf32>
    %24 = arith.addf %18, %23 : vector<14x128xf32>
    %c0_24 = arith.constant 0 : index
    %c4 = arith.constant 4 : index
    %c0_25 = arith.constant 0 : index
    %25 = vector.load %arg1[%c0_24, %c4, %c0_25] : memref<1x18x128xbf16, #tpu.memory_space<vmem>>, vector<1x14x128xbf16>
    %26 = vector.shape_cast %25 : vector<1x14x128xbf16> to vector<14x128xbf16>
    %c4_26 = arith.constant 4 : index
    %c0_27 = arith.constant 0 : index
    %c0_28 = arith.constant 0 : index
    %27 = vector.load %arg2[%c4_26, %c0_27, %c0_28] : memref<5x128x128xbf16, #tpu.memory_space<vmem>>, vector<1x128x128xbf16>
    %28 = vector.shape_cast %27 : vector<1x128x128xbf16> to vector<128x128xbf16>
    %cst_29 = arith.constant dense<0.000000e+00> : vector<14x128xf32>
    %29 = tpu.matmul %26, %28, %cst_29 {dimension_numbers = #tpu.dot_dimension_numbers<[1], [0], [0], [1], [0, 0, 1, 1], [], []>} : vector<14x128xbf16>, vector<128x128xbf16>, vector<14x128xf32> -> vector<14x128xf32>
    %30 = arith.addf %24, %29 : vector<14x128xf32>
    %c0_30 = arith.constant 0 : index
    %c0_31 = arith.constant 0 : index
    %31 = vector.load %arg3[%c0_30, %c0_31] : memref<1x128xf32, #tpu.memory_space<vmem>>, vector<1x128xf32>
    %32 = vector.broadcast %31 : vector<1x128xf32> to vector<14x128xf32>
    %33 = arith.addf %30, %32 : vector<14x128xf32>
    %cst_32 = arith.constant 0.000000e+00 : bf16
    %34 = vector.broadcast %cst_32 : bf16 to vector<1x1x128xbf16>
    %c0_33 = arith.constant 0 : index
    %c0_34 = arith.constant 0 : index
    %c0_35 = arith.constant 0 : index
    %35 = vector.load %arg9[%c0_33, %c0_34, %c0_35] : memref<1x16x128xbf16, #tpu.memory_space<vmem>>, vector<1x1x128xbf16>
    tpu.vector_store %arg9[%c0_33, %c0_34, %c0_35], %34 {strides = array<i32>} : memref<1x16x128xbf16, #tpu.memory_space<vmem>>, vector<1x1x128xbf16>,
    %cst_36 = arith.constant 0.000000e+00 : bf16
    %36 = vector.broadcast %cst_36 : bf16 to vector<1x1x128xbf16>
    %c0_37 = arith.constant 0 : index
    %c15 = arith.constant 15 : index
    %c0_38 = arith.constant 0 : index
    %37 = vector.load %arg9[%c0_37, %c15, %c0_38] : memref<1x16x128xbf16, #tpu.memory_space<vmem>>, vector<1x1x128xbf16>
    tpu.vector_store %arg9[%c0_37, %c15, %c0_38], %36 {strides = array<i32>} : memref<1x16x128xbf16, #tpu.memory_space<vmem>>, vector<1x1x128xbf16>,
    %38 = vector.shape_cast %33 : vector<14x128xf32> to vector<1x14x128xf32>
    %39 = arith.truncf %38 : vector<1x14x128xf32> to vector<1x14x128xbf16>
    %c0_39 = arith.constant 0 : index
    %c1_40 = arith.constant 1 : index
    %c0_41 = arith.constant 0 : index
    %40 = vector.load %arg9[%c0_39, %c1_40, %c0_41] : memref<1x16x128xbf16, #tpu.memory_space<vmem>>, vector<1x14x128xbf16>
    tpu.vector_store %arg9[%c0_39, %c1_40, %c0_41], %39 {strides = array<i32>} : memref<1x16x128xbf16, #tpu.memory_space<vmem>>, vector<1x14x128xbf16>,
    %cst_42 = arith.constant 0.000000e+00 : f32
    %41 = vector.broadcast %cst_42 : f32 to vector<12x128xf32>
    %c0_43 = arith.constant 0 : index
    %c0_44 = arith.constant 0 : index
    %c0_45 = arith.constant 0 : index
    %42 = vector.load %arg9[%c0_43, %c0_44, %c0_45] : memref<1x16x128xbf16, #tpu.memory_space<vmem>>, vector<1x12x128xbf16>
    %43 = vector.shape_cast %42 : vector<1x12x128xbf16> to vector<12x128xbf16>
    %c0_46 = arith.constant 0 : index
    %c0_47 = arith.constant 0 : index
    %c0_48 = arith.constant 0 : index
    %44 = vector.load %arg4[%c0_46, %c0_47, %c0_48] : memref<5x128x128xbf16, #tpu.memory_space<vmem>>, vector<1x128x128xbf16>
    %45 = vector.shape_cast %44 : vector<1x128x128xbf16> to vector<128x128xbf16>
    %cst_49 = arith.constant dense<0.000000e+00> : vector<12x128xf32>
    %46 = tpu.matmul %43, %45, %cst_49 {dimension_numbers = #tpu.dot_dimension_numbers<[1], [0], [0], [1], [0, 0, 1, 1], [], []>} : vector<12x128xbf16>, vector<128x128xbf16>, vector<12x128xf32> -> vector<12x128xf32>
    %47 = arith.addf %41, %46 : vector<12x128xf32>
    %c0_50 = arith.constant 0 : index
    %c1_51 = arith.constant 1 : index
    %c0_52 = arith.constant 0 : index
    %48 = vector.load %arg9[%c0_50, %c1_51, %c0_52] : memref<1x16x128xbf16, #tpu.memory_space<vmem>>, vector<1x12x128xbf16>
    %49 = vector.shape_cast %48 : vector<1x12x128xbf16> to vector<12x128xbf16>
    %c1_53 = arith.constant 1 : index
    %c0_54 = arith.constant 0 : index
    %c0_55 = arith.constant 0 : index
    %50 = vector.load %arg4[%c1_53, %c0_54, %c0_55] : memref<5x128x128xbf16, #tpu.memory_space<vmem>>, vector<1x128x128xbf16>
    %51 = vector.shape_cast %50 : vector<1x128x128xbf16> to vector<128x128xbf16>
    %cst_56 = arith.constant dense<0.000000e+00> : vector<12x128xf32>
    %52 = tpu.matmul %49, %51, %cst_56 {dimension_numbers = #tpu.dot_dimension_numbers<[1], [0], [0], [1], [0, 0, 1, 1], [], []>} : vector<12x128xbf16>, vector<128x128xbf16>, vector<12x128xf32> -> vector<12x128xf32>
    %53 = arith.addf %47, %52 : vector<12x128xf32>
    %c0_57 = arith.constant 0 : index
    %c2_58 = arith.constant 2 : index
    %c0_59 = arith.constant 0 : index
    %54 = vector.load %arg9[%c0_57, %c2_58, %c0_59] : memref<1x16x128xbf16, #tpu.memory_space<vmem>>, vector<1x12x128xbf16>
    %55 = vector.shape_cast %54 : vector<1x12x128xbf16> to vector<12x128xbf16>
    %c2_60 = arith.constant 2 : index
    %c0_61 = arith.constant 0 : index
    %c0_62 = arith.constant 0 : index
    %56 = vector.load %arg4[%c2_60, %c0_61, %c0_62] : memref<5x128x128xbf16, #tpu.memory_space<vmem>>, vector<1x128x128xbf16>
    %57 = vector.shape_cast %56 : vector<1x128x128xbf16> to vector<128x128xbf16>
    %cst_63 = arith.constant dense<0.000000e+00> : vector<12x128xf32>
    %58 = tpu.matmul %55, %57, %cst_63 {dimension_numbers = #tpu.dot_dimension_numbers<[1], [0], [0], [1], [0, 0, 1, 1], [], []>} : vector<12x128xbf16>, vector<128x128xbf16>, vector<12x128xf32> -> vector<12x128xf32>
    %59 = arith.addf %53, %58 : vector<12x128xf32>
    %c0_64 = arith.constant 0 : index
    %c3_65 = arith.constant 3 : index
    %c0_66 = arith.constant 0 : index
    %60 = vector.load %arg9[%c0_64, %c3_65, %c0_66] : memref<1x16x128xbf16, #tpu.memory_space<vmem>>, vector<1x12x128xbf16>
    %61 = vector.shape_cast %60 : vector<1x12x128xbf16> to vector<12x128xbf16>
    %c3_67 = arith.constant 3 : index
    %c0_68 = arith.constant 0 : index
    %c0_69 = arith.constant 0 : index
    %62 = vector.load %arg4[%c3_67, %c0_68, %c0_69] : memref<5x128x128xbf16, #tpu.memory_space<vmem>>, vector<1x128x128xbf16>
    %63 = vector.shape_cast %62 : vector<1x128x128xbf16> to vector<128x128xbf16>
    %cst_70 = arith.constant dense<0.000000e+00> : vector<12x128xf32>
    %64 = tpu.matmul %61, %63, %cst_70 {dimension_numbers = #tpu.dot_dimension_numbers<[1], [0], [0], [1], [0, 0, 1, 1], [], []>} : vector<12x128xbf16>, vector<128x128xbf16>, vector<12x128xf32> -> vector<12x128xf32>
    %65 = arith.addf %59, %64 : vector<12x128xf32>
    %c0_71 = arith.constant 0 : index
    %c4_72 = arith.constant 4 : index
    %c0_73 = arith.constant 0 : index
    %66 = vector.load %arg9[%c0_71, %c4_72, %c0_73] : memref<1x16x128xbf16, #tpu.memory_space<vmem>>, vector<1x12x128xbf16>
    %67 = vector.shape_cast %66 : vector<1x12x128xbf16> to vector<12x128xbf16>
    %c4_74 = arith.constant 4 : index
    %c0_75 = arith.constant 0 : index
    %c0_76 = arith.constant 0 : index
    %68 = vector.load %arg4[%c4_74, %c0_75, %c0_76] : memref<5x128x128xbf16, #tpu.memory_space<vmem>>, vector<1x128x128xbf16>
    %69 = vector.shape_cast %68 : vector<1x128x128xbf16> to vector<128x128xbf16>
    %cst_77 = arith.constant dense<0.000000e+00> : vector<12x128xf32>
    %70 = tpu.matmul %67, %69, %cst_77 {dimension_numbers = #tpu.dot_dimension_numbers<[1], [0], [0], [1], [0, 0, 1, 1], [], []>} : vector<12x128xbf16>, vector<128x128xbf16>, vector<12x128xf32> -> vector<12x128xf32>
    %71 = arith.addf %65, %70 : vector<12x128xf32>
    %c0_78 = arith.constant 0 : index
    %c0_79 = arith.constant 0 : index
    %72 = vector.load %arg5[%c0_78, %c0_79] : memref<1x128xf32, #tpu.memory_space<vmem>>, vector<1x128xf32>
    %73 = vector.broadcast %72 : vector<1x128xf32> to vector<12x128xf32>
    %74 = arith.addf %71, %73 : vector<12x128xf32>
    %75 = vector.shape_cast %74 : vector<12x128xf32> to vector<1x12x128xf32>
    %76 = arith.truncf %75 : vector<1x12x128xf32> to vector<1x12x128xbf16>
    %c0_80 = arith.constant 0 : index
    %c0_81 = arith.constant 0 : index
    %c0_82 = arith.constant 0 : index
    %77 = vector.load %arg7[%c0_80, %c0_81, %c0_82] : memref<1x12x128xbf16, #tpu.memory_space<vmem>>, vector<1x12x128xbf16>
    tpu.vector_store %arg7[%c0_80, %c0_81, %c0_82], %76 {strides = array<i32>} : memref<1x12x128xbf16, #tpu.memory_space<vmem>>, vector<1x12x128xbf16>,
    %cst_83 = arith.constant dense<0.000000e+00> : vector<128xf32>
    %78 = vector.multi_reduction <add>, %74, %cst_83 [0] : vector<12x128xf32> to vector<128xf32>
    %79 = vector.shape_cast %78 : vector<128xf32> to vector<1x128xf32>
    %80 = arith.mulf %74, %74 : vector<12x128xf32>
    %cst_84 = arith.constant dense<0.000000e+00> : vector<128xf32>
    %81 = vector.multi_reduction <add>, %80, %cst_84 [0] : vector<12x128xf32> to vector<128xf32>
    %82 = vector.shape_cast %81 : vector<128xf32> to vector<1x128xf32>
    %c0_85 = arith.constant 0 : index
    %c0_86 = arith.constant 0 : index
    %83 = vector.load %arg6[%c0_85, %c0_86] : memref<128x128xf32, #tpu.memory_space<vmem>>, vector<128x128xf32>
    %cst_87 = arith.constant dense<0.000000e+00> : vector<1x128xf32>
    %84 = tpu.matmul %79, %83, %cst_87 {dimension_numbers = #tpu.dot_dimension_numbers<[1], [0], [0], [1], [0, 0, 1, 1], [], []>} : vector<1x128xf32>, vector<128x128xf32>, vector<1x128xf32> -> vector<1x128xf32>
    %c0_88 = arith.constant 0 : index
    %c0_89 = arith.constant 0 : index
    %85 = vector.load %arg6[%c0_88, %c0_89] : memref<128x128xf32, #tpu.memory_space<vmem>>, vector<128x128xf32>
    %cst_90 = arith.constant dense<0.000000e+00> : vector<1x128xf32>
    %86 = tpu.matmul %82, %85, %cst_90 {dimension_numbers = #tpu.dot_dimension_numbers<[1], [0], [0], [1], [0, 0, 1, 1], [], []>} : vector<1x128xf32>, vector<128x128xf32>, vector<1x128xf32> -> vector<1x128xf32>
    %87 = tpu.concatenate %84, %86 in 0 : vector<1x128xf32>, vector<1x128xf32> -> vector<2x128xf32>
    %88 = vector.shape_cast %87 : vector<2x128xf32> to vector<1x2x128xf32>
    %c0_91 = arith.constant 0 : index
    %c0_92 = arith.constant 0 : index
    %c0_93 = arith.constant 0 : index
    %89 = vector.load %arg8[%c0_91, %c0_92, %c0_93] : memref<1x2x128xf32, #tpu.memory_space<vmem>>, vector<1x2x128xf32>
    tpu.vector_store %arg8[%c0_91, %c0_92, %c0_93], %88 {strides = array<i32>} : memref<1x2x128xf32, #tpu.memory_space<vmem>>, vector<1x2x128xf32>,
    return
  }
  func.func @transform_0(%arg0: i32) -> (i32, i32, i32) {
    %c0_i32 = arith.constant 0 : i32
    %c0_i32_0 = arith.constant 0 : i32
    %c0_i32_1 = arith.constant 0 : i32
    return %arg0, %c0_i32, %c0_i32_0 : i32, i32, i32
  }
  func.func @transform_1(%arg0: i32) -> (i32, i32, i32) {
    %c0_i32 = arith.constant 0 : i32
    %c0_i32_0 = arith.constant 0 : i32
    %c0_i32_1 = arith.constant 0 : i32
    %c0_i32_2 = arith.constant 0 : i32
    return %c0_i32, %c0_i32_0, %c0_i32_1 : i32, i32, i32
  }
  func.func @transform_2(%arg0: i32) -> (i32, i32) {
    %c0_i32 = arith.constant 0 : i32
    %c0_i32_0 = arith.constant 0 : i32
    %c0_i32_1 = arith.constant 0 : i32
    return %c0_i32, %c0_i32_0 : i32, i32
  }
  func.func @transform_3(%arg0: i32) -> (i32, i32, i32) {
    %c0_i32 = arith.constant 0 : i32
    %c0_i32_0 = arith.constant 0 : i32
    %c0_i32_1 = arith.constant 0 : i32
    %c0_i32_2 = arith.constant 0 : i32
    return %c0_i32, %c0_i32_0, %c0_i32_1 : i32, i32, i32
  }
  func.func @transform_4(%arg0: i32) -> (i32, i32) {
    %c0_i32 = arith.constant 0 : i32
    %c0_i32_0 = arith.constant 0 : i32
    %c0_i32_1 = arith.constant 0 : i32
    return %c0_i32, %c0_i32_0 : i32, i32
  }
  func.func @transform_5(%arg0: i32) -> (i32, i32) {
    %c0_i32 = arith.constant 0 : i32
    %c0_i32_0 = arith.constant 0 : i32
    %c0_i32_1 = arith.constant 0 : i32
    return %c0_i32, %c0_i32_0 : i32, i32
  }
  func.func @transform_6(%arg0: i32) -> (i32, i32, i32) {
    %c0_i32 = arith.constant 0 : i32
    %c0_i32_0 = arith.constant 0 : i32
    %c0_i32_1 = arith.constant 0 : i32
    return %arg0, %c0_i32, %c0_i32_0 : i32, i32, i32
  }
  func.func @transform_7(%arg0: i32) -> (i32, i32, i32) {
    %c0_i32 = arith.constant 0 : i32
    %c0_i32_0 = arith.constant 0 : i32
    %c0_i32_1 = arith.constant 0 : i32
    return %arg0, %c0_i32, %c0_i32_0 : i32, i32, i32
  }
}

module attributes {stable_mosaic.version = 11 : i64} {
  func.func @bn_apply_kernel(%arg0: i32, %arg1: memref<1x12x128xbf16, #tpu.memory_space<vmem>>, %arg2: memref<1x1x128xf32, #tpu.memory_space<vmem>>, %arg3: memref<1x1x128xf32, #tpu.memory_space<vmem>>, %arg4: memref<1x12x128xf32, #tpu.memory_space<vmem>>) attributes {dimension_semantics = [#tpu.dimension_semantics<parallel>], iteration_bounds = array<i64: 2>, scalar_prefetch = 0 : i64, scratch_operands = 0 : i64, tpu.core_type = #tpu.core_type<tc>, window_params = [{transform_indices = @transform_0, window_bounds = array<i64: 1, 12, 128>}, {pipeline_mode = #tpu.pipeline_mode<synchronous>, transform_indices = @transform_1, window_bounds = array<i64: 1, 1, 128>}, {pipeline_mode = #tpu.pipeline_mode<synchronous>, transform_indices = @transform_2, window_bounds = array<i64: 1, 1, 128>}, {transform_indices = @transform_3, window_bounds = array<i64: 1, 12, 128>}]} {
    %c0 = arith.constant 0 : index
    %c0_0 = arith.constant 0 : index
    %c0_1 = arith.constant 0 : index
    %0 = vector.load %arg1[%c0, %c0_0, %c0_1] : memref<1x12x128xbf16, #tpu.memory_space<vmem>>, vector<1x12x128xbf16>
    %1 = arith.extf %0 : vector<1x12x128xbf16> to vector<1x12x128xf32>
    %c0_2 = arith.constant 0 : index
    %c0_3 = arith.constant 0 : index
    %c0_4 = arith.constant 0 : index
    %2 = vector.load %arg2[%c0_2, %c0_3, %c0_4] : memref<1x1x128xf32, #tpu.memory_space<vmem>>, vector<1x1x128xf32>
    %3 = vector.broadcast %2 : vector<1x1x128xf32> to vector<1x12x128xf32>
    %4 = arith.mulf %1, %3 : vector<1x12x128xf32>
    %c0_5 = arith.constant 0 : index
    %c0_6 = arith.constant 0 : index
    %c0_7 = arith.constant 0 : index
    %5 = vector.load %arg3[%c0_5, %c0_6, %c0_7] : memref<1x1x128xf32, #tpu.memory_space<vmem>>, vector<1x1x128xf32>
    %6 = vector.broadcast %5 : vector<1x1x128xf32> to vector<1x12x128xf32>
    %7 = arith.addf %4, %6 : vector<1x12x128xf32>
    %cst = arith.constant 0.000000e+00 : f32
    %8 = vector.broadcast %cst : f32 to vector<1x12x128xf32>
    %9 = arith.maximumf %7, %8 : vector<1x12x128xf32>
    %c0_8 = arith.constant 0 : index
    %c0_9 = arith.constant 0 : index
    %c0_10 = arith.constant 0 : index
    %10 = vector.load %arg4[%c0_8, %c0_9, %c0_10] : memref<1x12x128xf32, #tpu.memory_space<vmem>>, vector<1x12x128xf32>
    tpu.vector_store %arg4[%c0_8, %c0_9, %c0_10], %9 {strides = array<i32>} : memref<1x12x128xf32, #tpu.memory_space<vmem>>, vector<1x12x128xf32>,
    return
  }
  func.func @transform_0(%arg0: i32) -> (i32, i32, i32) {
    %c0_i32 = arith.constant 0 : i32
    %c0_i32_0 = arith.constant 0 : i32
    %c0_i32_1 = arith.constant 0 : i32
    return %arg0, %c0_i32, %c0_i32_0 : i32, i32, i32
  }
  func.func @transform_1(%arg0: i32) -> (i32, i32, i32) {
    %c0_i32 = arith.constant 0 : i32
    %c0_i32_0 = arith.constant 0 : i32
    %c0_i32_1 = arith.constant 0 : i32
    %c0_i32_2 = arith.constant 0 : i32
    return %c0_i32, %c0_i32_0, %c0_i32_1 : i32, i32, i32
  }
  func.func @transform_2(%arg0: i32) -> (i32, i32, i32) {
    %c0_i32 = arith.constant 0 : i32
    %c0_i32_0 = arith.constant 0 : i32
    %c0_i32_1 = arith.constant 0 : i32
    %c0_i32_2 = arith.constant 0 : i32
    return %c0_i32, %c0_i32_0, %c0_i32_1 : i32, i32, i32
  }
  func.func @transform_3(%arg0: i32) -> (i32, i32, i32) {
    %c0_i32 = arith.constant 0 : i32
    %c0_i32_0 = arith.constant 0 : i32
    %c0_i32_1 = arith.constant 0 : i32
    return %arg0, %c0_i32, %c0_i32_0 : i32, i32, i32
  }
}

</mosaic_0001>

<llo_original>
// kernel: tile.23
$region0: #{tile.23}
  #allocation2 [shape = 's32[1]{0}', space=sflag, size = 0x4, scoped, tag = 'scoped memory for tile.23']
  %s0 = inlined_call_operand.hbm [shape: f32[8], index: 0, kind: input, shape index: {}]
  %s1 = inlined_call_operand.vmem [shape: f32[14,8], index: 1, kind: output, shape index: {}]
  $region1: #{tile.23} parent=0
    #allocation0 [shape = 'u8[512]{0}', space=vmem, size = 0x400, scoped, tag = 'operand span for operand 0']
    #allocation1 [shape = 's32[1]{0}', space=sflag, size = 0x4, scoped, tag = 'scoped memory for tile.23']
    %2 = vsyncpa [#allocation1], 0
    // Predicated region
    $region2: #{tile.23} parent=1 // pred_check
      _
    $region3: #{tile.23} parent=1 // pred_check_branch
      %4 = sbr.rel (0) target = $region5
    $region4: #{tile.23} parent=1 // pred_region
      %s6 = ssub.s32 16, 16
      %7 = vsyncadd [#allocation1], %s6
      %s9 = sshll.u32 [#allocation0], 4
      %s10 = int_to_ptr.vmem [resolvable:$true] %s9
      %12 = dma.hbm_to_vmem [thread:$0]  %s0, 16, %s10, [#allocation1]
    $region5: #{tile.23} parent=1 // pred_fallthru
      _
    // Predicated region
    $region6: #{tile.23} parent=1 // pred_check
      _
    $region7: #{tile.23} parent=1 // pred_check_branch
      %14 = sbr.rel (0) target = $region9
    $region8: #{tile.23} parent=1 // pred_region
      %15 = dma.done [#allocation1], 16
    $region9: #{tile.23} parent=1 // pred_fallthru
      _
    %v16 = vld [vmem:[#allocation0] ss:$0 sm:$0xff]
    %17 = vst [vmem:[%s1] sm:$0xff] %v16
    %s18 = scalar_lea.vmem %s1, 8
    %19 = vst [vmem:[%s18] sm:$0xff] %v16
    %20 = vsyncpa [#allocation1], 1

// kernel: tile.28
$region0: #{tile.28}
  #allocation2 [shape = 's32[1]{0}', space=sflag, size = 0x4, scoped, tag = 'scoped memory for tile.28']
  %s0 = inlined_call_operand.hbm [shape: f32[8], index: 0, kind: input, shape index: {}]
  %s1 = inlined_call_operand.vmem [shape: f32[12,8], index: 1, kind: output, shape index: {}]
  $region1: #{tile.28} parent=0
    #allocation0 [shape = 'u8[512]{0}', space=vmem, size = 0x400, scoped, tag = 'operand span for operand 0']
    #allocation1 [shape = 's32[1]{0}', space=sflag, size = 0x4, scoped, tag = 'scoped memory for tile.28']
    %2 = vsyncpa [#allocation1], 0
    // Predicated region
    $region2: #{tile.28} parent=1 // pred_check
      _
    $region3: #{tile.28} parent=1 // pred_check_branch
      %4 = sbr.rel (0) target = $region5
    $region4: #{tile.28} parent=1 // pred_region
      %s6 = ssub.s32 16, 16
      %7 = vsyncadd [#allocation1], %s6
      %s9 = sshll.u32 [#allocation0], 4
      %s10 = int_to_ptr.vmem [resolvable:$true] %s9
      %12 = dma.hbm_to_vmem [thread:$0]  %s0, 16, %s10, [#allocation1]
    $region5: #{tile.28} parent=1 // pred_fallthru
      _
    // Predicated region
    $region6: #{tile.28} parent=1 // pred_check
      _
    $region7: #{tile.28} parent=1 // pred_check_branch
      %14 = sbr.rel (0) target = $region9
    $region8: #{tile.28} parent=1 // pred_region
      %15 = dma.done [#allocation1], 16
    $region9: #{tile.28} parent=1 // pred_fallthru
      _
    %v16 = vld [vmem:[#allocation0] ss:$0 sm:$0xff]
    %17 = vst [vmem:[%s1] sm:$0xff] %v16
    %s18 = scalar_lea.vmem %s1, 8
    %19 = vst [vmem:[%s18] sm:$0xff] %v16
    %20 = vsyncpa [#allocation1], 1

// kernel: tile.24
$region0: #{tile.24}
  %s0 = inlined_call_operand.vmem [shape: f32[14,8], index: 0, kind: input, shape index: {}]
  %s1 = inlined_call_operand.vmem [shape: f32[112], index: 1, kind: output, shape index: {}]
  $region1: #{tile.24} parent=0
    #allocation0 [shape = 'u8[4096]{0}', space=vmem, size = 0x1000, scoped, tag = 'scoped mem for output reshape']
    %v2 = vld [vmem:[%s0] sm:$0x1]
    %vm3 = vcmask 64512
    %4 = vst.msk [vmem:[#allocation0] sm:$0x1] %vm3, %v2
    %s5 = scalar_lea.vmem %s0, 13
    %v6 = vld [vmem:[%s5] sm:$0x1]
    %7 = vrot.lane.b32.xlu0 %v6, 104
    %v8 = vpop.permute.xlu0 %7
    %vm9 = vcmask 917312
    %10 = vst.msk [vmem:[#allocation0] sm:$0x1] %vm9, %v8
    %s11 = scalar_lea.vmem %s0, 12
    %v12 = vld [vmem:[%s11] sm:$0x1]
    %13 = vrot.lane.b32.xlu0 %v12, 96
    %v14 = vpop.permute.xlu0 %13
    %vm15 = vcmask 851712
    %16 = vst.msk [vmem:[#allocation0] sm:$0x1] %vm15, %v14
    %s17 = scalar_lea.vmem %s0, 11
    %v18 = vld [vmem:[%s17] sm:$0x1]
    %19 = vrot.lane.b32.xlu0 %v18, 88
    %v20 = vpop.permute.xlu0 %19
    %vm21 = vcmask 786112
    %22 = vst.msk [vmem:[#allocation0] sm:$0x1] %vm21, %v20
    %s23 = scalar_lea.vmem %s0, 10
    %v24 = vld [vmem:[%s23] sm:$0x1]
    %25 = vrot.lane.b32.xlu0 %v24, 80
    %v26 = vpop.permute.xlu0 %25
    %vm27 = vcmask 720512
    %28 = vst.msk [vmem:[#allocation0] sm:$0x1] %vm27, %v26
    %s29 = scalar_lea.vmem %s0, 9
    %v30 = vld [vmem:[%s29] sm:$0x1]
    %31 = vrot.lane.b32.xlu0 %v30, 72
    %v32 = vpop.permute.xlu0 %31
    %vm33 = vcmask 654912
    %34 = vst.msk [vmem:[#allocation0] sm:$0x1] %vm33, %v32
    %s35 = scalar_lea.vmem %s0, 8
    %v36 = vld [vmem:[%s35] sm:$0x1]
    %37 = vrot.lane.b32.xlu0 %v36, 64
    %v38 = vpop.permute.xlu0 %37
    %vm39 = vcmask 589312
    %40 = vst.msk [vmem:[#allocation0] sm:$0x1] %vm39, %v38
    %s41 = scalar_lea.vmem %s0, 7
    %v42 = vld [vmem:[%s41] sm:$0x1]
    %43 = vrot.lane.b32.xlu0 %v42, 56
    %v44 = vpop.permute.xlu0 %43
    %vm45 = vcmask 523712
    %46 = vst.msk [vmem:[#allocation0] sm:$0x1] %vm45, %v44
    %s47 = scalar_lea.vmem %s0, 6
    %v48 = vld [vmem:[%s47] sm:$0x1]
    %49 = vrot.lane.b32.xlu0 %v48, 48
    %v50 = vpop.permute.xlu0 %49
    %vm51 = vcmask 458112
    %52 = vst.msk [vmem:[#allocation0] sm:$0x1] %vm51, %v50
    %s53 = scalar_lea.vmem %s0, 5
    %v54 = vld [vmem:[%s53] sm:$0x1]
    %55 = vrot.lane.b32.xlu0 %v54, 40
    %v56 = vpop.permute.xlu0 %55
    %vm57 = vcmask 392512
    %58 = vst.msk [vmem:[#allocation0] sm:$0x1] %vm57, %v56
    %s59 = scalar_lea.vmem %s0, 4
    %v60 = vld [vmem:[%s59] sm:$0x1]
    %61 = vrot.lane.b32.xlu0 %v60, 32
    %v62 = vpop.permute.xlu0 %61
    %vm63 = vcmask 326912
    %64 = vst.msk [vmem:[#allocation0] sm:$0x1] %vm63, %v62
    %s65 = scalar_lea.vmem %s0, 3
    %v66 = vld [vmem:[%s65] sm:$0x1]
    %67 = vrot.lane.b32.xlu0 %v66, 24
    %v68 = vpop.permute.xlu0 %67
    %vm69 = vcmask 261312
    %70 = vst.msk [vmem:[#allocation0] sm:$0x1] %vm69, %v68
    %s71 = scalar_lea.vmem %s0, 2
    %v72 = vld [vmem:[%s71] sm:$0x1]
    %73 = vrot.lane.b32.xlu0 %v72, 16
    %v74 = vpop.permute.xlu0 %73
    %vm75 = vcmask 195712
    %76 = vst.msk [vmem:[#allocation0] sm:$0x1] %vm75, %v74
    %s77 = scalar_lea.vmem %s0, 1
    %v78 = vld [vmem:[%s77] sm:$0x1]
    %79 = vrot.lane.b32.xlu0 %v78, 8
    %v80 = vpop.permute.xlu0 %79
    %vm81 = vcmask 130112
    %82 = vst.msk [vmem:[#allocation0] sm:$0x1] %vm81, %v80
    %s84 = sshllo.u32 0, 1
    %v86 = vld [vmem:[#allocation0] sm:%s84]
    %s87 = sshllo.u32 0, 1
    %88 = vst [vmem:[%s1] sm:%s87] %v86

// kernel: tile.29
$region0: #{tile.29}
  %s0 = inlined_call_operand.vmem [shape: f32[12,8], index: 0, kind: input, shape index: {}]
  %s1 = inlined_call_operand.vmem [shape: f32[96], index: 1, kind: output, shape index: {}]
  $region1: #{tile.29} parent=0
    #allocation0 [shape = 'u8[4096]{0}', space=vmem, size = 0x1000, scoped, tag = 'scoped mem for output reshape']
    %v2 = vld [vmem:[%s0] sm:$0x1]
    %vm3 = vcmask 64512
    %4 = vst.msk [vmem:[#allocation0] sm:$0x1] %vm3, %v2
    %s5 = scalar_lea.vmem %s0, 11
    %v6 = vld [vmem:[%s5] sm:$0x1]
    %7 = vrot.lane.b32.xlu0 %v6, 88
    %v8 = vpop.permute.xlu0 %7
    %vm9 = vcmask 786112
    %10 = vst.msk [vmem:[#allocation0] sm:$0x1] %vm9, %v8
    %s11 = scalar_lea.vmem %s0, 10
    %v12 = vld [vmem:[%s11] sm:$0x1]
    %13 = vrot.lane.b32.xlu0 %v12, 80
    %v14 = vpop.permute.xlu0 %13
    %vm15 = vcmask 720512
    %16 = vst.msk [vmem:[#allocation0] sm:$0x1] %vm15, %v14
    %s17 = scalar_lea.vmem %s0, 9
    %v18 = vld [vmem:[%s17] sm:$0x1]
    %19 = vrot.lane.b32.xlu0 %v18, 72
    %v20 = vpop.permute.xlu0 %19
    %vm21 = vcmask 654912
    %22 = vst.msk [vmem:[#allocation0] sm:$0x1] %vm21, %v20
    %s23 = scalar_lea.vmem %s0, 8
    %v24 = vld [vmem:[%s23] sm:$0x1]
    %25 = vrot.lane.b32.xlu0 %v24, 64
    %v26 = vpop.permute.xlu0 %25
    %vm27 = vcmask 589312
    %28 = vst.msk [vmem:[#allocation0] sm:$0x1] %vm27, %v26
    %s29 = scalar_lea.vmem %s0, 7
    %v30 = vld [vmem:[%s29] sm:$0x1]
    %31 = vrot.lane.b32.xlu0 %v30, 56
    %v32 = vpop.permute.xlu0 %31
    %vm33 = vcmask 523712
    %34 = vst.msk [vmem:[#allocation0] sm:$0x1] %vm33, %v32
    %s35 = scalar_lea.vmem %s0, 6
    %v36 = vld [vmem:[%s35] sm:$0x1]
    %37 = vrot.lane.b32.xlu0 %v36, 48
    %v38 = vpop.permute.xlu0 %37
    %vm39 = vcmask 458112
    %40 = vst.msk [vmem:[#allocation0] sm:$0x1] %vm39, %v38
    %s41 = scalar_lea.vmem %s0, 5
    %v42 = vld [vmem:[%s41] sm:$0x1]
    %43 = vrot.lane.b32.xlu0 %v42, 40
    %v44 = vpop.permute.xlu0 %43
    %vm45 = vcmask 392512
    %46 = vst.msk [vmem:[#allocation0] sm:$0x1] %vm45, %v44
    %s47 = scalar_lea.vmem %s0, 4
    %v48 = vld [vmem:[%s47] sm:$0x1]
    %49 = vrot.lane.b32.xlu0 %v48, 32
    %v50 = vpop.permute.xlu0 %49
    %vm51 = vcmask 326912
    %52 = vst.msk [vmem:[#allocation0] sm:$0x1] %vm51, %v50
    %s53 = scalar_lea.vmem %s0, 3
    %v54 = vld [vmem:[%s53] sm:$0x1]
    %55 = vrot.lane.b32.xlu0 %v54, 24
    %v56 = vpop.permute.xlu0 %55
    %vm57 = vcmask 261312
    %58 = vst.msk [vmem:[#allocation0] sm:$0x1] %vm57, %v56
    %s59 = scalar_lea.vmem %s0, 2
    %v60 = vld [vmem:[%s59] sm:$0x1]
    %61 = vrot.lane.b32.xlu0 %v60, 16
    %v62 = vpop.permute.xlu0 %61
    %vm63 = vcmask 195712
    %64 = vst.msk [vmem:[#allocation0] sm:$0x1] %vm63, %v62
    %s65 = scalar_lea.vmem %s0, 1
    %v66 = vld [vmem:[%s65] sm:$0x1]
    %67 = vrot.lane.b32.xlu0 %v66, 8
    %v68 = vpop.permute.xlu0 %67
    %vm69 = vcmask 130112
    %70 = vst.msk [vmem:[#allocation0] sm:$0x1] %vm69, %v68
    %s72 = sshllo.u32 0, 1
    %v74 = vld [vmem:[#allocation0] sm:%s72]
    %s75 = sshllo.u32 0, 1
    %76 = vst [vmem:[%s1] sm:%s75] %v74

// kernel: vgg_block_forward.2
$region0: #{vgg_block_forward.2}
  #allocation0 [shape = 'u32[]', space=smem, size = 0x4, offset = 0x4, fixed_abs, tag = 'smem constant byte address 0x4 - core index']
  #allocation1 [shape = 'u32[144,128]{1,0:T(1,128)}', space=vmem, size = 0x12000, scoped, tag = 'internal scratch']
  #allocation2 [shape = 'bf16[1,16,128]{2,1,0:T(16,128)(2,1)}', space=vmem, size = 0x1000, scoped, tag = 'scratch operand']
  %s0 = inlined_call_operand.vmem [shape: bf16[2,18,128], index: 0, kind: input, shape index: {}]
  %s1 = inlined_call_operand.vmem [shape: bf16[5,128,128], index: 1, kind: input, shape index: {}]
  %s2 = inlined_call_operand.vmem [shape: f32[1,128], index: 2, kind: input, shape index: {}]
  %s3 = inlined_call_operand.vmem [shape: bf16[5,128,128], index: 3, kind: input, shape index: {}]
  %s4 = inlined_call_operand.vmem [shape: f32[1,128], index: 4, kind: input, shape index: {}]
  %s5 = inlined_call_operand.vmem [shape: f32[128,128], index: 5, kind: input, shape index: {}]
  %s6 = inlined_call_operand.vmem [shape: bf16[2,12,128], index: 6, kind: output, shape index: {0}]
  %s7 = inlined_call_operand.vmem [shape: f32[2,2,128], index: 7, kind: output, shape index: {1}]
  %8 = xla_tuple %s6, %s7
  %s9 = sld [smem:[#allocation0]]
  $region65: #{vgg_block_forward.2} parent=0
    _
  %s11 = ssub.s32 1, %s9
  %s12 = scalar_select 0, %s11, %s9
  loop: start=0, step=1, limit=4
  $region2: #{vgg_block_forward.2} parent=0 // loop_pre_header
    _
  $region3: #{vgg_block_forward.2} parent=0 // loop_header
    %s14 = sphi 0, %s18
    %p15 = scmp.ge.s32.totalorder %s14, 4
    %s24 = sphi 0, %s26
    %s27 = sphi 0, %s24
    %s28 = sphi 0, %s27
    %s44 = sphi 0, %s28
    %s48 = sphi 0, %s48
    %s50 = sphi 0, %s48
    %s51 = sphi 0, %s50
    %s65 = sphi 0, %s51
    %s69 = sphi 0, %s69
    %s71 = sphi 0, %s69
    %s72 = sphi 0, %s71
    %s86 = sphi 0, %s72
    %s90 = sphi 0, %s90
    %s92 = sphi 0, %s90
    %s93 = sphi 0, %s92
    %s107 = sphi 0, %s93
    %s111 = sphi 0, %s111
    %s113 = sphi 0, %s111
    %s114 = sphi 0, %s113
    %s128 = sphi 0, %s114
    %s132 = sphi 0, %s132
    %s134 = sphi 0, %s132
    %s135 = sphi 0, %s134
    %s149 = sphi 0, %s135
    %s155 = sphi 0, %s157
    %s158 = sphi 0, %s155
    %s159 = sphi 0, %s158
    %s175 = sphi 0, %s159
    %s181 = sphi 0, %s183
    %s184 = sphi 0, %s181
    %s185 = sphi 0, %s184
    %s201 = sphi 0, %s185
  $region4: #{vgg_block_forward.2} parent=0 // loop_header_branch
    %17 = sbr.rel (%p15) target = $region8
  $region5: #{vgg_block_forward.2} parent=0 // loop_body
    %s19 = ssub.s32 %s14, 1
    %s20 = ssub.s32 %s14, 2
    %s21 = sadd.s32 %s14, 1
    %s22 = ssub.s32 %s14, %s21
    %p23 = scmp.eq.s32.totalorder %s22, 0
    %s25 = sadd.s32 %s24, 1
    %s26 = scalar_select %p23, %s24, %s25
    %p29 = pneg %p23
    %p30 = scmp.eq.s32.totalorder %s14, 1
    %p31 = por %p29, %p30
    %p32 = scmp.ne.s32.totalorder %s24, %s27
    %p33 = scmp.eq.s32.totalorder %s14, 0
    %p34 = por %p32, %p33
    %p35 = scmp.ne.s32.totalorder %s24, %s27
    %p36 = scmp.eq.s32.totalorder %s19, 1
    %p37 = por %p35, %p36
    %p38 = scmp.ne.s32.totalorder %s27, %s28
    %p39 = scmp.eq.s32.totalorder %s19, 0
    %p40 = por %p38, %p39
    %p41 = scmp.ne.s32.totalorder %s27, %s28
    %p42 = scmp.eq.s32.totalorder %s20, 1
    %p43 = por %p41, %p42
    %p45 = scmp.ne.s32.totalorder %s28, %s44
    %p46 = scmp.eq.s32.totalorder %s20, 0
    %p47 = por %p45, %p46
    %s49 = sadd.s32 %s48, 1
    %p52 = scmp.eq.s32.totalorder %s14, 1
    %p53 = scmp.ne.s32.totalorder %s48, %s50
    %p54 = scmp.eq.s32.totalorder %s14, 0
    %p55 = por %p53, %p54
    %p56 = scmp.ne.s32.totalorder %s48, %s50
    %p57 = scmp.eq.s32.totalorder %s19, 1
    %p58 = por %p56, %p57
    %p59 = scmp.ne.s32.totalorder %s50, %s51
    %p60 = scmp.eq.s32.totalorder %s19, 0
    %p61 = por %p59, %p60
    %p62 = scmp.ne.s32.totalorder %s50, %s51
    %p63 = scmp.eq.s32.totalorder %s20, 1
    %p64 = por %p62, %p63
    %p66 = scmp.ne.s32.totalorder %s51, %s65
    %p67 = scmp.eq.s32.totalorder %s20, 0
    %p68 = por %p66, %p67
    %s70 = sadd.s32 %s69, 1
    %p73 = scmp.eq.s32.totalorder %s14, 1
    %p74 = scmp.ne.s32.totalorder %s69, %s71
    %p75 = scmp.eq.s32.totalorder %s14, 0
    %p76 = por %p74, %p75
    %p77 = scmp.ne.s32.totalorder %s69, %s71
    %p78 = scmp.eq.s32.totalorder %s19, 1
    %p79 = por %p77, %p78
    %p80 = scmp.ne.s32.totalorder %s71, %s72
    %p81 = scmp.eq.s32.totalorder %s19, 0
    %p82 = por %p80, %p81
    %p83 = scmp.ne.s32.totalorder %s71, %s72
    %p84 = scmp.eq.s32.totalorder %s20, 1
    %p85 = por %p83, %p84
    %p87 = scmp.ne.s32.totalorder %s72, %s86
    %p88 = scmp.eq.s32.totalorder %s20, 0
    %p89 = por %p87, %p88
    %s91 = sadd.s32 %s90, 1
    %p94 = scmp.eq.s32.totalorder %s14, 1
    %p95 = scmp.ne.s32.totalorder %s90, %s92
    %p96 = scmp.eq.s32.totalorder %s14, 0
    %p97 = por %p95, %p96
    %p98 = scmp.ne.s32.totalorder %s90, %s92
    %p99 = scmp.eq.s32.totalorder %s19, 1
    %p100 = por %p98, %p99
    %p101 = scmp.ne.s32.totalorder %s92, %s93
    %p102 = scmp.eq.s32.totalorder %s19, 0
    %p103 = por %p101, %p102
    %p104 = scmp.ne.s32.totalorder %s92, %s93
    %p105 = scmp.eq.s32.totalorder %s20, 1
    %p106 = por %p104, %p105
    %p108 = scmp.ne.s32.totalorder %s93, %s107
    %p109 = scmp.eq.s32.totalorder %s20, 0
    %p110 = por %p108, %p109
    %s112 = sadd.s32 %s111, 1
    %p115 = scmp.eq.s32.totalorder %s14, 1
    %p116 = scmp.ne.s32.totalorder %s111, %s113
    %p117 = scmp.eq.s32.totalorder %s14, 0
    %p118 = por %p116, %p117
    %p119 = scmp.ne.s32.totalorder %s111, %s113
    %p120 = scmp.eq.s32.totalorder %s19, 1
    %p121 = por %p119, %p120
    %p122 = scmp.ne.s32.totalorder %s113, %s114
    %p123 = scmp.eq.s32.totalorder %s19, 0
    %p124 = por %p122, %p123
    %p125 = scmp.ne.s32.totalorder %s113, %s114
    %p126 = scmp.eq.s32.totalorder %s20, 1
    %p127 = por %p125, %p126
    %p129 = scmp.ne.s32.totalorder %s114, %s128
    %p130 = scmp.eq.s32.totalorder %s20, 0
    %p131 = por %p129, %p130
    %s133 = sadd.s32 %s132, 1
    %p136 = scmp.eq.s32.totalorder %s14, 1
    %p137 = scmp.ne.s32.totalorder %s132, %s134
    %p138 = scmp.eq.s32.totalorder %s14, 0
    %p139 = por %p137, %p138
    %p140 = scmp.ne.s32.totalorder %s132, %s134
    %p141 = scmp.eq.s32.totalorder %s19, 1
    %p142 = por %p140, %p141
    %p143 = scmp.ne.s32.totalorder %s134, %s135
    %p144 = scmp.eq.s32.totalorder %s19, 0
    %p145 = por %p143, %p144
    %p146 = scmp.ne.s32.totalorder %s134, %s135
    %p147 = scmp.eq.s32.totalorder %s20, 1
    %p148 = por %p146, %p147
    %p150 = scmp.ne.s32.totalorder %s135, %s149
    %p151 = scmp.eq.s32.totalorder %s20, 0
    %p152 = por %p150, %p151
    %s153 = ssub.s32 %s14, %s21
    %p154 = scmp.eq.s32.totalorder %s153, 0
    %s156 = sadd.s32 %s155, 1
    %s157 = scalar_select %p154, %s155, %s156
    %p160 = pneg %p154
    %p161 = scmp.eq.s32.totalorder %s14, 1
    %p162 = por %p160, %p161
    %p163 = scmp.ne.s32.totalorder %s155, %s158
    %p164 = scmp.eq.s32.totalorder %s14, 0
    %p165 = por %p163, %p164
    %p166 = scmp.ne.s32.totalorder %s155, %s158
    %p167 = scmp.eq.s32.totalorder %s19, 1
    %p168 = por %p166, %p167
    %p169 = scmp.ne.s32.totalorder %s158, %s159
    %p170 = scmp.eq.s32.totalorder %s19, 0
    %p171 = por %p169, %p170
    %p172 = scmp.ne.s32.totalorder %s158, %s159
    %p173 = scmp.eq.s32.totalorder %s20, 1
    %p174 = por %p172, %p173
    %p176 = scmp.ne.s32.totalorder %s159, %s175
    %p177 = scmp.eq.s32.totalorder %s20, 0
    %p178 = por %p176, %p177
    %s179 = ssub.s32 %s14, %s21
    %p180 = scmp.eq.s32.totalorder %s179, 0
    %s182 = sadd.s32 %s181, 1
    %s183 = scalar_select %p180, %s181, %s182
    %p186 = pneg %p180
    %p187 = scmp.eq.s32.totalorder %s14, 1
    %p188 = por %p186, %p187
    %p189 = scmp.ne.s32.totalorder %s181, %s184
    %p190 = scmp.eq.s32.totalorder %s14, 0
    %p191 = por %p189, %p190
    %p192 = scmp.ne.s32.totalorder %s181, %s184
    %p193 = scmp.eq.s32.totalorder %s19, 1
    %p194 = por %p192, %p193
    %p195 = scmp.ne.s32.totalorder %s184, %s185
    %p196 = scmp.eq.s32.totalorder %s19, 0
    %p197 = por %p195, %p196
    %p198 = scmp.ne.s32.totalorder %s184, %s185
    %p199 = scmp.eq.s32.totalorder %s20, 1
    %p200 = por %p198, %p199
    %p202 = scmp.ne.s32.totalorder %s185, %s201
    %p203 = scmp.eq.s32.totalorder %s20, 0
    %p204 = por %p202, %p203
    %p205 = scmp.le.s32.totalorder 1, %s14
    %p206 = scmp.lt.s32.totalorder %s14, 3
    %p207 = pnand %p205, %p206
    %p208 = pneg %p207
    // Predicated region
    $region9: #{vgg_block_forward.2} parent=5 // pred_check
      _
    $region10: #{vgg_block_forward.2} parent=5 // pred_check_branch
      %210 = sbr.rel (%p207) target = $region12
    $region11: #{vgg_block_forward.2} parent=5 // pred_region
      %s211 = ssub.s32 %s14, 1
      // Predicated region
      $region13: #{vgg_block_forward.2} parent=11 // pred_check
        %p212 = pneg %p61
      $region14: #{vgg_block_forward.2} parent=11 // pred_check_branch
        %214 = sbr.rel (%p212) target = $region16
      $region15: #{vgg_block_forward.2} parent=11 // pred_region
        _
      $region16: #{vgg_block_forward.2} parent=11 // pred_fallthru
        _
      // Predicated region
      $region17: #{vgg_block_forward.2} parent=11 // pred_check
        %p215 = pneg %p82
      $region18: #{vgg_block_forward.2} parent=11 // pred_check_branch
        %217 = sbr.rel (%p215) target = $region20
      $region19: #{vgg_block_forward.2} parent=11 // pred_region
        _
      $region20: #{vgg_block_forward.2} parent=11 // pred_fallthru
        _
      // Predicated region
      $region21: #{vgg_block_forward.2} parent=11 // pred_check
        %p218 = pneg %p103
      $region22: #{vgg_block_forward.2} parent=11 // pred_check_branch
        %220 = sbr.rel (%p218) target = $region24
      $region23: #{vgg_block_forward.2} parent=11 // pred_region
        _
      $region24: #{vgg_block_forward.2} parent=11 // pred_fallthru
        _
      // Predicated region
      $region25: #{vgg_block_forward.2} parent=11 // pred_check
        %p221 = pneg %p124
      $region26: #{vgg_block_forward.2} parent=11 // pred_check_branch
        %223 = sbr.rel (%p221) target = $region28
      $region27: #{vgg_block_forward.2} parent=11 // pred_region
        _
      $region28: #{vgg_block_forward.2} parent=11 // pred_fallthru
        _
      // Predicated region
      $region29: #{vgg_block_forward.2} parent=11 // pred_check
        %p224 = pneg %p145
      $region30: #{vgg_block_forward.2} parent=11 // pred_check_branch
        %226 = sbr.rel (%p224) target = $region32
      $region31: #{vgg_block_forward.2} parent=11 // pred_region
        _
      $region32: #{vgg_block_forward.2} parent=11 // pred_fallthru
        _
    $region12: #{vgg_block_forward.2} parent=5 // pred_fallthru
      _
    %p227 = scmp.lt.s32.totalorder %s14, 2
    // Predicated region
    $region33: #{vgg_block_forward.2} parent=5 // pred_check
      %p228 = pneg %p227
    $region34: #{vgg_block_forward.2} parent=5 // pred_check_branch
      %230 = sbr.rel (%p228) target = $region36
    $region35: #{vgg_block_forward.2} parent=5 // pred_region
      // Predicated region
      $region37: #{vgg_block_forward.2} parent=35 // pred_check
        %p231 = pneg %p34
      $region38: #{vgg_block_forward.2} parent=35 // pred_check_branch
        %233 = sbr.rel (%p231) target = $region40
      $region39: #{vgg_block_forward.2} parent=35 // pred_region
        %p234 = scmp.lt.s32.totalorder %s14, 1
        %s235 = scalar_select %p234, %s14, 1
        %s236 = smul.addr %s235, 3
        %s237 = smul.addr %s236, 4
        %s238 = scalar_lea.vmem %s0, %s237
      $region40: #{vgg_block_forward.2} parent=35 // pred_fallthru
        _
    $region36: #{vgg_block_forward.2} parent=5 // pred_fallthru
      _
    %p239 = scmp.le.s32.totalorder 1, %s14
    %p240 = scmp.lt.s32.totalorder %s14, 3
    %p241 = pnand %p239, %p240
    %p242 = pneg %p241
    // Predicated region
    $region41: #{vgg_block_forward.2} parent=5 // pred_check
      _
    $region42: #{vgg_block_forward.2} parent=5 // pred_check_branch
      %244 = sbr.rel (%p241) target = $region44
    $region43: #{vgg_block_forward.2} parent=5 // pred_region
      %s245 = ssub.s32 %s14, 1
      %p246 = scmp.lt.s32.totalorder %s19, 1
      %s247 = scalar_select %p246, %s19, 1
      %s248 = smul.addr %s247, 3
      %s249 = smul.addr %s248, 4
      %s250 = scalar_lea.vmem %s0, %s249
      %p251 = pneg %p40
      %p252 = pneg %p37
      %p253 = pneg %p61
      %p254 = pneg %p58
      %p255 = pneg %p82
      %p256 = pneg %p79
      %p257 = pneg %p103
      %p258 = pneg %p100
      %p259 = pneg %p124
      %p260 = pneg %p121
      %p261 = pneg %p145
      %p262 = pneg %p142
      %p263 = pneg %p171
      %p264 = pneg %p168
      %p265 = scmp.lt.s32.totalorder %s19, 1
      %s266 = scalar_select %p265, %s19, 1
      %s267 = smul.addr %s266, 2
      %s268 = smul.addr %s267, 4
      %s269 = scalar_lea.vmem %s6, %s268
      %p270 = pneg %p197
      %p271 = pneg %p194
      %p272 = scmp.lt.s32.totalorder %s19, 1
      %s273 = scalar_select %p272, %s19, 1
      %s274 = smul.addr %s273, 2
      %s275 = scalar_lea.vmem %s7, %s274
      %p276 = scmp.lt.s32.totalorder %s19, 1
      %s277 = scalar_select %p276, %s19, 1
      %s278 = smul.addr %s277, 3
      %s279 = smul.addr %s278, 4
      %s280 = scalar_lea.vmem %s0, %s279
      %p281 = scmp.lt.s32.totalorder %s19, 1
      %s282 = scalar_select %p281, %s19, 1
      %s283 = smul.addr %s282, 2
      %s284 = smul.addr %s283, 4
      %s285 = scalar_lea.vmem %s6, %s284
      %p286 = scmp.lt.s32.totalorder %s19, 1
      %s287 = scalar_select %p286, %s19, 1
      %s288 = smul.addr %s287, 2
      %s289 = scalar_lea.vmem %s7, %s288
      %v291 = vld [vmem:[%s280] sm:$0xf]
      %v292 = vld [vmem:[%s280 + $0x4] sm:$0x7]
      %v293 = vld [vmem:[%s1] sm:$0xf]
      %v294 = vld [vmem:[%s1 + $0x4] sm:$0xf]
      %v295 = vld [vmem:[%s1 + $0x8] sm:$0xf]
      %v296 = vld [vmem:[%s1 + $0xc] sm:$0xf]
      %v297 = vld [vmem:[%s1 + $0x10] sm:$0xf]
      %v298 = vld [vmem:[%s1 + $0x14] sm:$0xf]
      %v299 = vld [vmem:[%s1 + $0x18] sm:$0xf]
      %v300 = vld [vmem:[%s1 + $0x1c] sm:$0xf]
      %v301 = vld [vmem:[%s1 + $0x20] sm:$0xf]
      %v302 = vld [vmem:[%s1 + $0x24] sm:$0xf]
      %v303 = vld [vmem:[%s1 + $0x28] sm:$0xf]
      %v304 = vld [vmem:[%s1 + $0x2c] sm:$0xf]
      %v305 = vld [vmem:[%s1 + $0x30] sm:$0xf]
      %v306 = vld [vmem:[%s1 + $0x34] sm:$0xf]
      %v307 = vld [vmem:[%s1 + $0x38] sm:$0xf]
      %v308 = vld [vmem:[%s1 + $0x3c] sm:$0xf]
      %v309 = vld [vmem:[%s280 + $0x4] sm:$0xf]
      %s310 = scalar_lea.vmem %s1, 64
      %v311 = vld [vmem:[%s310] sm:$0xf]
      %v312 = vld [vmem:[%s310 + $0x4] sm:$0xf]
      %v313 = vld [vmem:[%s310 + $0x8] sm:$0xf]
      %v314 = vld [vmem:[%s310 + $0xc] sm:$0xf]
      %v315 = vld [vmem:[%s310 + $0x10] sm:$0xf]
      %v316 = vld [vmem:[%s310 + $0x14] sm:$0xf]
      %v317 = vld [vmem:[%s310 + $0x18] sm:$0xf]
      %v318 = vld [vmem:[%s310 + $0x1c] sm:$0xf]
      %v319 = vld [vmem:[%s310 + $0x20] sm:$0xf]
      %v320 = vld [vmem:[%s310 + $0x24] sm:$0xf]
      %v321 = vld [vmem:[%s310 + $0x28] sm:$0xf]
      %v322 = vld [vmem:[%s310 + $0x2c] sm:$0xf]
      %v323 = vld [vmem:[%s310 + $0x30] sm:$0xf]
      %v324 = vld [vmem:[%s310 + $0x34] sm:$0xf]
      %v325 = vld [vmem:[%s310 + $0x38] sm:$0xf]
      %v326 = vld [vmem:[%s310 + $0x3c] sm:$0xf]
      %v329 = vunpack.c.l.b16 %v291
      %v330 = vunpack.c.l.b16 %v309
      %v331 = vpack.c.b16 %v330, %v329
      %v333 = vshrl.u32 %v331, 16
      %v335 = vshll.u32 %v331, 16
      %v337 = vrot.slane %v335, 1
      %v338 = vor.u32 %v333, %v337
      %v356 = vunpack.c.l.b16 %v311
      %v357 = vunpack.c.l.b16 %v312
      %v358 = vunpack.c.l.b16 %v313
      %v359 = vunpack.c.l.b16 %v314
      %v360 = vunpack.c.l.b16 %v315
      %v361 = vunpack.c.l.b16 %v316
      %v362 = vunpack.c.l.b16 %v317
      %v363 = vunpack.c.l.b16 %v318
      %v364 = vunpack.c.l.b16 %v319
      %v365 = vunpack.c.l.b16 %v320
      %v366 = vunpack.c.l.b16 %v321
      %v367 = vunpack.c.l.b16 %v322
      %v368 = vunpack.c.l.b16 %v323
      %v369 = vunpack.c.l.b16 %v324
      %v370 = vunpack.c.l.b16 %v325
      %v371 = vunpack.c.l.b16 %v326
      %v372 = vpack.c.b16 %v357, %v356
      %v373 = vpack.c.b16 %v359, %v358
      %v374 = vpack.c.b16 %v361, %v360
      %v375 = vpack.c.b16 %v363, %v362
      %v376 = vpack.c.b16 %v365, %v364
      %v377 = vpack.c.b16 %v367, %v366
      %v378 = vpack.c.b16 %v369, %v368
      %v379 = vpack.c.b16 %v371, %v370
      %388 = vmatprep.subr.bf16.mxu0 0
      %389 = vmatpush1.bf16.msra.mxu0 %v372
      %390 = vmatprep.subr.bf16.mxu0 0
      %391 = vmatpush1.bf16.msra.mxu0 %v373
      %392 = vmatprep.subr.bf16.mxu0 0
      %393 = vmatpush1.bf16.msra.mxu0 %v374
      %394 = vmatprep.subr.bf16.mxu0 0
      %395 = vmatpush1.bf16.msra.mxu0 %v375
      %396 = vmatprep.subr.bf16.mxu0 0
      %397 = vmatpush1.bf16.msra.mxu0 %v376
      %398 = vmatprep.subr.bf16.mxu0 0
      %399 = vmatpush1.bf16.msra.mxu0 %v377
      %400 = vmatprep.subr.bf16.mxu0 0
      %401 = vmatpush1.bf16.msra.mxu0 %v378
      %402 = vmatprep.subr.bf16.mxu0 0
      %403 = vmatpush1.bf16.msra.mxu0 %v379
      %404 = vmatprep.subr.bf16.mxu0 0
      %405 = vmatpush1.bf16.msra.mxu0 0
      %406 = vmatprep.subr.bf16.mxu0 0
      %407 = vmatpush1.bf16.msra.mxu0 0
      %408 = vmatprep.subr.bf16.mxu0 0
      %409 = vmatpush1.bf16.msra.mxu0 0
      %410 = vmatprep.subr.bf16.mxu0 0
      %411 = vmatpush1.bf16.msra.mxu0 0
      %412 = vmatprep.subr.bf16.mxu0 0
      %413 = vmatpush1.bf16.msra.mxu0 0
      %414 = vmatprep.subr.bf16.mxu0 0
      %415 = vmatpush1.bf16.msra.mxu0 0
      %416 = vmatprep.subr.bf16.mxu0 0
      %417 = vmatpush1.bf16.msra.mxu0 0
      %418 = vmatprep.subr.bf16.mxu0 0
      %419 = vmatpush1.bf16.msra.mxu0 0
      %420 = vmatprep.mubr.bf16.mxu0 0
      %421 = vmatmul.mubr.bf16.gmra.mrb[0].mxu0 %v338
      %v422 = vpop.f32.mrb[0].mxu0
      %v423 = vadd.f32 0.0, %v422
      %v424 = vpop.f32.mrb[0].mxu0
      %v425 = vpop.f32.mrb[0].mxu0
      %v426 = vadd.f32 0.0, %v425
      %v427 = vpop.f32.mrb[0].mxu0
      %428 = vdwg.mxu0
      %v430 = vunpack.c.l.b16 %v292
      %v431 = vpack.c.b16 %v430, %v329
      %v449 = vunpack.c.l.b16 %v293
      %v450 = vunpack.c.l.b16 %v294
      %v451 = vunpack.c.l.b16 %v295
      %v452 = vunpack.c.l.b16 %v296
      %v453 = vunpack.c.l.b16 %v297
      %v454 = vunpack.c.l.b16 %v298
      %v455 = vunpack.c.l.b16 %v299
      %v456 = vunpack.c.l.b16 %v300
      %v457 = vunpack.c.l.b16 %v301
      %v458 = vunpack.c.l.b16 %v302
      %v459 = vunpack.c.l.b16 %v303
      %v460 = vunpack.c.l.b16 %v304
      %v461 = vunpack.c.l.b16 %v305
      %v462 = vunpack.c.l.b16 %v306
      %v463 = vunpack.c.l.b16 %v307
      %v464 = vunpack.c.l.b16 %v308
      %v465 = vpack.c.b16 %v450, %v449
      %v466 = vpack.c.b16 %v452, %v451
      %v467 = vpack.c.b16 %v454, %v453
      %v468 = vpack.c.b16 %v456, %v455
      %v469 = vpack.c.b16 %v458, %v457
      %v470 = vpack.c.b16 %v460, %v459
      %v471 = vpack.c.b16 %v462, %v461
      %v472 = vpack.c.b16 %v464, %v463
      %481 = vmatprep.subr.bf16.mxu0 0
      %482 = vmatpush1.bf16.msra.mxu0 %v465
      %483 = vmatprep.subr.bf16.mxu0 0
      %484 = vmatpush1.bf16.msra.mxu0 %v466
      %485 = vmatprep.subr.bf16.mxu0 0
      %486 = vmatpush1.bf16.msra.mxu0 %v467
      %487 = vmatprep.subr.bf16.mxu0 0
      %488 = vmatpush1.bf16.msra.mxu0 %v468
      %489 = vmatprep.subr.bf16.mxu0 0
      %490 = vmatpush1.bf16.msra.mxu0 %v469
      %491 = vmatprep.subr.bf16.mxu0 0
      %492 = vmatpush1.bf16.msra.mxu0 %v470
      %493 = vmatprep.subr.bf16.mxu0 0
      %494 = vmatpush1.bf16.msra.mxu0 %v471
      %495 = vmatprep.subr.bf16.mxu0 0
      %496 = vmatpush1.bf16.msra.mxu0 %v472
      %497 = vmatprep.subr.bf16.mxu0 0
      %498 = vmatpush1.bf16.msra.mxu0 0
      %499 = vmatprep.subr.bf16.mxu0 0
      %500 = vmatpush1.bf16.msra.mxu0 0
      %501 = vmatprep.subr.bf16.mxu0 0
      %502 = vmatpush1.bf16.msra.mxu0 0
      %503 = vmatprep.subr.bf16.mxu0 0
      %504 = vmatpush1.bf16.msra.mxu0 0
      %505 = vmatprep.subr.bf16.mxu0 0
      %506 = vmatpush1.bf16.msra.mxu0 0
      %507 = vmatprep.subr.bf16.mxu0 0
      %508 = vmatpush1.bf16.msra.mxu0 0
      %509 = vmatprep.subr.bf16.mxu0 0
      %510 = vmatpush1.bf16.msra.mxu0 0
      %511 = vmatprep.subr.bf16.mxu0 0
      %512 = vmatpush1.bf16.msra.mxu0 0
      %513 = vmatprep.mubr.bf16.mxu0 0
      %514 = vmatmul.mubr.bf16.gmra.mrb[0].mxu0 %v431
      %v515 = vpop.f32.mrb[0].mxu0
      %v516 = vadd.f32 %v423, %v515
      %v517 = vpop.f32.mrb[0].mxu0
      %v518 = vpop.f32.mrb[0].mxu0
      %v519 = vadd.f32 %v426, %v518
      %v520 = vpop.f32.mrb[0].mxu0
      %521 = vdwg.mxu0
      %v522 = vld [vmem:[%s280] sm:$0xe]
      %s523 = scalar_lea.vmem %s1, 128
      %v524 = vld [vmem:[%s523] sm:$0xf]
      %v525 = vld [vmem:[%s523 + $0x4] sm:$0xf]
      %v526 = vld [vmem:[%s523 + $0x8] sm:$0xf]
      %v527 = vld [vmem:[%s523 + $0xc] sm:$0xf]
      %v528 = vld [vmem:[%s523 + $0x10] sm:$0xf]
      %v529 = vld [vmem:[%s523 + $0x14] sm:$0xf]
      %v530 = vld [vmem:[%s523 + $0x18] sm:$0xf]
      %v531 = vld [vmem:[%s523 + $0x1c] sm:$0xf]
      %v532 = vld [vmem:[%s523 + $0x20] sm:$0xf]
      %v533 = vld [vmem:[%s523 + $0x24] sm:$0xf]
      %v534 = vld [vmem:[%s523 + $0x28] sm:$0xf]
      %v535 = vld [vmem:[%s523 + $0x2c] sm:$0xf]
      %v536 = vld [vmem:[%s523 + $0x30] sm:$0xf]
      %v537 = vld [vmem:[%s523 + $0x34] sm:$0xf]
      %v538 = vld [vmem:[%s523 + $0x38] sm:$0xf]
      %v539 = vld [vmem:[%s523 + $0x3c] sm:$0xf]
      %v541 = vunpack.c.l.b16 %v522
      %v542 = vpack.c.b16 %v330, %v541
      %v543 = vrot.slane %v542, 1
      %v561 = vunpack.c.l.b16 %v524
      %v562 = vunpack.c.l.b16 %v525
      %v563 = vunpack.c.l.b16 %v526
      %v564 = vunpack.c.l.b16 %v527
      %v565 = vunpack.c.l.b16 %v528
      %v566 = vunpack.c.l.b16 %v529
      %v567 = vunpack.c.l.b16 %v530
      %v568 = vunpack.c.l.b16 %v531
      %v569 = vunpack.c.l.b16 %v532
      %v570 = vunpack.c.l.b16 %v533
      %v571 = vunpack.c.l.b16 %v534
      %v572 = vunpack.c.l.b16 %v535
      %v573 = vunpack.c.l.b16 %v536
      %v574 = vunpack.c.l.b16 %v537
      %v575 = vunpack.c.l.b16 %v538
      %v576 = vunpack.c.l.b16 %v539
      %v577 = vpack.c.b16 %v562, %v561
      %v578 = vpack.c.b16 %v564, %v563
      %v579 = vpack.c.b16 %v566, %v565
      %v580 = vpack.c.b16 %v568, %v567
      %v581 = vpack.c.b16 %v570, %v569
      %v582 = vpack.c.b16 %v572, %v571
      %v583 = vpack.c.b16 %v574, %v573
      %v584 = vpack.c.b16 %v576, %v575
      %593 = vmatprep.subr.bf16.mxu0 0
      %594 = vmatpush1.bf16.msra.mxu0 %v577
      %595 = vmatprep.subr.bf16.mxu0 0
      %596 = vmatpush1.bf16.msra.mxu0 %v578
      %597 = vmatprep.subr.bf16.mxu0 0
      %598 = vmatpush1.bf16.msra.mxu0 %v579
      %599 = vmatprep.subr.bf16.mxu0 0
      %600 = vmatpush1.bf16.msra.mxu0 %v580
      %601 = vmatprep.subr.bf16.mxu0 0
      %602 = vmatpush1.bf16.msra.mxu0 %v581
      %603 = vmatprep.subr.bf16.mxu0 0
      %604 = vmatpush1.bf16.msra.mxu0 %v582
      %605 = vmatprep.subr.bf16.mxu0 0
      %606 = vmatpush1.bf16.msra.mxu0 %v583
      %607 = vmatprep.subr.bf16.mxu0 0
      %608 = vmatpush1.bf16.msra.mxu0 %v584
      %609 = vmatprep.subr.bf16.mxu0 0
      %610 = vmatpush1.bf16.msra.mxu0 0
      %611 = vmatprep.subr.bf16.mxu0 0
      %612 = vmatpush1.bf16.msra.mxu0 0
      %613 = vmatprep.subr.bf16.mxu0 0
      %614 = vmatpush1.bf16.msra.mxu0 0
      %615 = vmatprep.subr.bf16.mxu0 0
      %616 = vmatpush1.bf16.msra.mxu0 0
      %617 = vmatprep.subr.bf16.mxu0 0
      %618 = vmatpush1.bf16.msra.mxu0 0
      %619 = vmatprep.subr.bf16.mxu0 0
      %620 = vmatpush1.bf16.msra.mxu0 0
      %621 = vmatprep.subr.bf16.mxu0 0
      %622 = vmatpush1.bf16.msra.mxu0 0
      %623 = vmatprep.subr.bf16.mxu0 0
      %624 = vmatpush1.bf16.msra.mxu0 0
      %625 = vmatprep.mubr.bf16.mxu0 0
      %626 = vmatmul.mubr.bf16.gmra.mrb[0].mxu0 %v543
      %v627 = vpop.f32.mrb[0].mxu0
      %v628 = vadd.f32 0.0, %v627
      %v629 = vpop.f32.mrb[0].mxu0
      %v630 = vpop.f32.mrb[0].mxu0
      %v631 = vadd.f32 0.0, %v630
      %v632 = vpop.f32.mrb[0].mxu0
      %633 = vdwg.mxu0
      %v634 = vadd.f32 %v516, %v628
      %v635 = vadd.f32 %v519, %v631
      %v636 = vld [vmem:[%s280] sm:$0xe]
      %v637 = vld [vmem:[%s280 + $0x4] sm:$0xf]
      %v638 = vld [vmem:[%s280 + $0x8] sm:$0x1]
      %s639 = scalar_lea.vmem %s1, 192
      %v640 = vld [vmem:[%s639] sm:$0xf]
      %v641 = vld [vmem:[%s639 + $0x4] sm:$0xf]
      %v642 = vld [vmem:[%s639 + $0x8] sm:$0xf]
      %v643 = vld [vmem:[%s639 + $0xc] sm:$0xf]
      %v644 = vld [vmem:[%s639 + $0x10] sm:$0xf]
      %v645 = vld [vmem:[%s639 + $0x14] sm:$0xf]
      %v646 = vld [vmem:[%s639 + $0x18] sm:$0xf]
      %v647 = vld [vmem:[%s639 + $0x1c] sm:$0xf]
      %v648 = vld [vmem:[%s639 + $0x20] sm:$0xf]
      %v649 = vld [vmem:[%s639 + $0x24] sm:$0xf]
      %v650 = vld [vmem:[%s639 + $0x28] sm:$0xf]
      %v651 = vld [vmem:[%s639 + $0x2c] sm:$0xf]
      %v652 = vld [vmem:[%s639 + $0x30] sm:$0xf]
      %v653 = vld [vmem:[%s639 + $0x34] sm:$0xf]
      %v654 = vld [vmem:[%s639 + $0x38] sm:$0xf]
      %v655 = vld [vmem:[%s639 + $0x3c] sm:$0xf]
      %v659 = vunpack.c.l.b16 %v636
      %v660 = vunpack.c.l.b16 %v637
      %v661 = vunpack.c.l.b16 %v638
      %v662 = vpack.c.b16 %v660, %v659
      %v663 = vpack.c.b16 %v661, %v661
      %vm664 = vsmask.f32 6400
      %v666 = vshrl.u32 %v662, 16
      %v668 = vrot.slane %v666, 1
      %v669 = vshll.u32 %v662, 16
      %v671 = vrot.slane %v669, 2
      %v672 = vor.u32 %v668, %v671
      %v674 = vshll.u32 %v663, 16
      %v676 = vrot.slane %v674, 2
      %v677 = vsel %vm664, %v672, %v676
      %v695 = vunpack.c.l.b16 %v640
      %v696 = vunpack.c.l.b16 %v641
      %v697 = vunpack.c.l.b16 %v642
      %v698 = vunpack.c.l.b16 %v643
      %v699 = vunpack.c.l.b16 %v644
      %v700 = vunpack.c.l.b16 %v645
      %v701 = vunpack.c.l.b16 %v646
      %v702 = vunpack.c.l.b16 %v647
      %v703 = vunpack.c.l.b16 %v648
      %v704 = vunpack.c.l.b16 %v649
      %v705 = vunpack.c.l.b16 %v650
      %v706 = vunpack.c.l.b16 %v651
      %v707 = vunpack.c.l.b16 %v652
      %v708 = vunpack.c.l.b16 %v653
      %v709 = vunpack.c.l.b16 %v654
      %v710 = vunpack.c.l.b16 %v655
      %v711 = vpack.c.b16 %v696, %v695
      %v712 = vpack.c.b16 %v698, %v697
      %v713 = vpack.c.b16 %v700, %v699
      %v714 = vpack.c.b16 %v702, %v701
      %v715 = vpack.c.b16 %v704, %v703
      %v716 = vpack.c.b16 %v706, %v705
      %v717 = vpack.c.b16 %v708, %v707
      %v718 = vpack.c.b16 %v710, %v709
      %727 = vmatprep.subr.bf16.mxu0 0
      %728 = vmatpush1.bf16.msra.mxu0 %v711
      %729 = vmatprep.subr.bf16.mxu0 0
      %730 = vmatpush1.bf16.msra.mxu0 %v712
      %731 = vmatprep.subr.bf16.mxu0 0
      %732 = vmatpush1.bf16.msra.mxu0 %v713
      %733 = vmatprep.subr.bf16.mxu0 0
      %734 = vmatpush1.bf16.msra.mxu0 %v714
      %735 = vmatprep.subr.bf16.mxu0 0
      %736 = vmatpush1.bf16.msra.mxu0 %v715
      %737 = vmatprep.subr.bf16.mxu0 0
      %738 = vmatpush1.bf16.msra.mxu0 %v716
      %739 = vmatprep.subr.bf16.mxu0 0
      %740 = vmatpush1.bf16.msra.mxu0 %v717
      %741 = vmatprep.subr.bf16.mxu0 0
      %742 = vmatpush1.bf16.msra.mxu0 %v718
      %743 = vmatprep.subr.bf16.mxu0 0
      %744 = vmatpush1.bf16.msra.mxu0 0
      %745 = vmatprep.subr.bf16.mxu0 0
      %746 = vmatpush1.bf16.msra.mxu0 0
      %747 = vmatprep.subr.bf16.mxu0 0
      %748 = vmatpush1.bf16.msra.mxu0 0
      %749 = vmatprep.subr.bf16.mxu0 0
      %750 = vmatpush1.bf16.msra.mxu0 0
      %751 = vmatprep.subr.bf16.mxu0 0
      %752 = vmatpush1.bf16.msra.mxu0 0
      %753 = vmatprep.subr.bf16.mxu0 0
      %754 = vmatpush1.bf16.msra.mxu0 0
      %755 = vmatprep.subr.bf16.mxu0 0
      %756 = vmatpush1.bf16.msra.mxu0 0
      %757 = vmatprep.subr.bf16.mxu0 0
      %758 = vmatpush1.bf16.msra.mxu0 0
      %759 = vmatprep.mubr.bf16.mxu0 0
      %760 = vmatmul.mubr.bf16.gmra.mrb[0].mxu0 %v677
      %v761 = vpop.f32.mrb[0].mxu0
      %v762 = vadd.f32 0.0, %v761
      %v763 = vpop.f32.mrb[0].mxu0
      %v764 = vpop.f32.mrb[0].mxu0
      %v765 = vadd.f32 0.0, %v764
      %v766 = vpop.f32.mrb[0].mxu0
      %767 = vdwg.mxu0
      %v768 = vadd.f32 %v634, %v762
      %v769 = vadd.f32 %v635, %v765
      %v770 = vld [vmem:[%s280] sm:$0xc]
      %s771 = scalar_lea.vmem %s1, 256
      %v772 = vld [vmem:[%s771] sm:$0xf]
      %v773 = vld [vmem:[%s771 + $0x4] sm:$0xf]
      %v774 = vld [vmem:[%s771 + $0x8] sm:$0xf]
      %v775 = vld [vmem:[%s771 + $0xc] sm:$0xf]
      %v776 = vld [vmem:[%s771 + $0x10] sm:$0xf]
      %v777 = vld [vmem:[%s771 + $0x14] sm:$0xf]
      %v778 = vld [vmem:[%s771 + $0x18] sm:$0xf]
      %v779 = vld [vmem:[%s771 + $0x1c] sm:$0xf]
      %v780 = vld [vmem:[%s771 + $0x20] sm:$0xf]
      %v781 = vld [vmem:[%s771 + $0x24] sm:$0xf]
      %v782 = vld [vmem:[%s771 + $0x28] sm:$0xf]
      %v783 = vld [vmem:[%s771 + $0x2c] sm:$0xf]
      %v784 = vld [vmem:[%s771 + $0x30] sm:$0xf]
      %v785 = vld [vmem:[%s771 + $0x34] sm:$0xf]
      %v786 = vld [vmem:[%s771 + $0x38] sm:$0xf]
      %v787 = vld [vmem:[%s771 + $0x3c] sm:$0xf]
      %v789 = vunpack.c.l.b16 %v770
      %v790 = vpack.c.b16 %v660, %v789
      %vm791 = vcmask 1045504
      %v792 = vrot.slane %v790, 2
      %v793 = vrot.slane %v663, 2
      %v794 = vsel %vm791, %v792, %v793
      %v812 = vunpack.c.l.b16 %v772
      %v813 = vunpack.c.l.b16 %v773
      %v814 = vunpack.c.l.b16 %v774
      %v815 = vunpack.c.l.b16 %v775
      %v816 = vunpack.c.l.b16 %v776
      %v817 = vunpack.c.l.b16 %v777
      %v818 = vunpack.c.l.b16 %v778
      %v819 = vunpack.c.l.b16 %v779
      %v820 = vunpack.c.l.b16 %v780
      %v821 = vunpack.c.l.b16 %v781
      %v822 = vunpack.c.l.b16 %v782
      %v823 = vunpack.c.l.b16 %v783
      %v824 = vunpack.c.l.b16 %v784
      %v825 = vunpack.c.l.b16 %v785
      %v826 = vunpack.c.l.b16 %v786
      %v827 = vunpack.c.l.b16 %v787
      %v828 = vpack.c.b16 %v813, %v812
      %v829 = vpack.c.b16 %v815, %v814
      %v830 = vpack.c.b16 %v817, %v816
      %v831 = vpack.c.b16 %v819, %v818
      %v832 = vpack.c.b16 %v821, %v820
      %v833 = vpack.c.b16 %v823, %v822
      %v834 = vpack.c.b16 %v825, %v824
      %v835 = vpack.c.b16 %v827, %v826
      %844 = vmatprep.subr.bf16.mxu0 0
      %845 = vmatpush1.bf16.msra.mxu0 %v828
      %846 = vmatprep.subr.bf16.mxu0 0
      %847 = vmatpush1.bf16.msra.mxu0 %v829
      %848 = vmatprep.subr.bf16.mxu0 0
      %849 = vmatpush1.bf16.msra.mxu0 %v830
      %850 = vmatprep.subr.bf16.mxu0 0
      %851 = vmatpush1.bf16.msra.mxu0 %v831
      %852 = vmatprep.subr.bf16.mxu0 0
      %853 = vmatpush1.bf16.msra.mxu0 %v832
      %854 = vmatprep.subr.bf16.mxu0 0
      %855 = vmatpush1.bf16.msra.mxu0 %v833
      %856 = vmatprep.subr.bf16.mxu0 0
      %857 = vmatpush1.bf16.msra.mxu0 %v834
      %858 = vmatprep.subr.bf16.mxu0 0
      %859 = vmatpush1.bf16.msra.mxu0 %v835
      %860 = vmatprep.subr.bf16.mxu0 0
      %861 = vmatpush1.bf16.msra.mxu0 0
      %862 = vmatprep.subr.bf16.mxu0 0
      %863 = vmatpush1.bf16.msra.mxu0 0
      %864 = vmatprep.subr.bf16.mxu0 0
      %865 = vmatpush1.bf16.msra.mxu0 0
      %866 = vmatprep.subr.bf16.mxu0 0
      %867 = vmatpush1.bf16.msra.mxu0 0
      %868 = vmatprep.subr.bf16.mxu0 0
      %869 = vmatpush1.bf16.msra.mxu0 0
      %870 = vmatprep.subr.bf16.mxu0 0
      %871 = vmatpush1.bf16.msra.mxu0 0
      %872 = vmatprep.subr.bf16.mxu0 0
      %873 = vmatpush1.bf16.msra.mxu0 0
      %874 = vmatprep.subr.bf16.mxu0 0
      %875 = vmatpush1.bf16.msra.mxu0 0
      %876 = vmatprep.mubr.bf16.mxu0 0
      %877 = vmatmul.mubr.bf16.gmra.mrb[0].mxu0 %v794
      %v878 = vpop.f32.mrb[0].mxu0
      %v879 = vadd.f32 0.0, %v878
      %v880 = vpop.f32.mrb[0].mxu0
      %v881 = vpop.f32.mrb[0].mxu0
      %v882 = vadd.f32 0.0, %v881
      %v883 = vpop.f32.mrb[0].mxu0
      %884 = vdwg.mxu0
      %v885 = vadd.f32 %v768, %v879
      %v886 = vadd.f32 %v769, %v882
      %v887 = vld [vmem:[%s2] sm:$0x1]
      %v889 = vlaneseq
      %v890 = vshrl.u32 %v889, 7
      %v891 = vsub.s32 0, %v890
      %v892 = vrot.slane %v887, %v891
      %v894 = vadd.f32 %v885, %v892
      %v895 = vadd.f32 %v886, %v892
      %vm896 = vcmask 1040384
      %vm897 = vsmask.f32 256
      %vm898 = vmand %vm896, %vm897
      %v899 = vld [vmem:[#allocation2] sm:$0x1]
      %v900 = vsel %vm898, 0, %v899
      %901 = vst [vmem:[#allocation2] sm:$0x1] %v900
      %vm902 = vcmask 1047559
      %vm903 = vsmask.f32 7966
      %vm904 = vmand %vm902, %vm903
      %v905 = vld [vmem:[#allocation2] sm:$0x80]
      %v906 = vsel %vm904, 0, %v905
      %907 = vst [vmem:[#allocation2] sm:$0x80] %v906
      %v908 = vpack.c.bf16 %v895, %v894
      %v910 = vshrl.u32 %v908, 16
      %v912 = vrot.slane %v910, 7
      %v913 = vshll.u32 %v908, 16
      %v915 = vor.u32 %v912, %v913
      %vm917 = vcmask 1047552
      %vm918 = vsmask.f32 7426
      %vm919 = vmand %vm917, %vm918
      %v920 = vld [vmem:[#allocation2] sm:$0xff]
      %v921 = vsel %vm919, %v915, %v920
      %922 = vst [vmem:[#allocation2] sm:$0xff] %v921
      %v923 = vld [vmem:[#allocation2] sm:$0x3f]
      %v924 = vld [vmem:[%s3] sm:$0xf]
      %v925 = vld [vmem:[%s3 + $0x4] sm:$0xf]
      %v926 = vld [vmem:[%s3 + $0x8] sm:$0xf]
      %v927 = vld [vmem:[%s3 + $0xc] sm:$0xf]
      %v928 = vld [vmem:[%s3 + $0x10] sm:$0xf]
      %v929 = vld [vmem:[%s3 + $0x14] sm:$0xf]
      %v930 = vld [vmem:[%s3 + $0x18] sm:$0xf]
      %v931 = vld [vmem:[%s3 + $0x1c] sm:$0xf]
      %v932 = vld [vmem:[%s3 + $0x20] sm:$0xf]
      %v933 = vld [vmem:[%s3 + $0x24] sm:$0xf]
      %v934 = vld [vmem:[%s3 + $0x28] sm:$0xf]
      %v935 = vld [vmem:[%s3 + $0x2c] sm:$0xf]
      %v936 = vld [vmem:[%s3 + $0x30] sm:$0xf]
      %v937 = vld [vmem:[%s3 + $0x34] sm:$0xf]
      %v938 = vld [vmem:[%s3 + $0x38] sm:$0xf]
      %v939 = vld [vmem:[%s3 + $0x3c] sm:$0xf]
      %v940 = vld [vmem:[#allocation2] sm:$0x7f]
      %s941 = scalar_lea.vmem %s3, 64
      %v942 = vld [vmem:[%s941] sm:$0xf]
      %v943 = vld [vmem:[%s941 + $0x4] sm:$0xf]
      %v944 = vld [vmem:[%s941 + $0x8] sm:$0xf]
      %v945 = vld [vmem:[%s941 + $0xc] sm:$0xf]
      %v946 = vld [vmem:[%s941 + $0x10] sm:$0xf]
      %v947 = vld [vmem:[%s941 + $0x14] sm:$0xf]
      %v948 = vld [vmem:[%s941 + $0x18] sm:$0xf]
      %v949 = vld [vmem:[%s941 + $0x1c] sm:$0xf]
      %v950 = vld [vmem:[%s941 + $0x20] sm:$0xf]
      %v951 = vld [vmem:[%s941 + $0x24] sm:$0xf]
      %v952 = vld [vmem:[%s941 + $0x28] sm:$0xf]
      %v953 = vld [vmem:[%s941 + $0x2c] sm:$0xf]
      %v954 = vld [vmem:[%s941 + $0x30] sm:$0xf]
      %v955 = vld [vmem:[%s941 + $0x34] sm:$0xf]
      %v956 = vld [vmem:[%s941 + $0x38] sm:$0xf]
      %v957 = vld [vmem:[%s941 + $0x3c] sm:$0xf]
      %v959 = vshrl.u32 %v940, 16
      %v961 = vshll.u32 %v940, 16
      %v963 = vrot.slane %v961, 1
      %v964 = vor.u32 %v959, %v963
      %v982 = vunpack.c.l.b16 %v942
      %v983 = vunpack.c.l.b16 %v943
      %v984 = vunpack.c.l.b16 %v944
      %v985 = vunpack.c.l.b16 %v945
      %v986 = vunpack.c.l.b16 %v946
      %v987 = vunpack.c.l.b16 %v947
      %v988 = vunpack.c.l.b16 %v948
      %v989 = vunpack.c.l.b16 %v949
      %v990 = vunpack.c.l.b16 %v950
      %v991 = vunpack.c.l.b16 %v951
      %v992 = vunpack.c.l.b16 %v952
      %v993 = vunpack.c.l.b16 %v953
      %v994 = vunpack.c.l.b16 %v954
      %v995 = vunpack.c.l.b16 %v955
      %v996 = vunpack.c.l.b16 %v956
      %v997 = vunpack.c.l.b16 %v957
      %v998 = vpack.c.b16 %v983, %v982
      %v999 = vpack.c.b16 %v985, %v984
      %v1000 = vpack.c.b16 %v987, %v986
      %v1001 = vpack.c.b16 %v989, %v988
      %v1002 = vpack.c.b16 %v991, %v990
      %v1003 = vpack.c.b16 %v993, %v992
      %v1004 = vpack.c.b16 %v995, %v994
      %v1005 = vpack.c.b16 %v997, %v996
      %1014 = vmatprep.subr.bf16.mxu0 0
      %1015 = vmatpush1.bf16.msra.mxu0 %v998
      %1016 = vmatprep.subr.bf16.mxu0 0
      %1017 = vmatpush1.bf16.msra.mxu0 %v999
      %1018 = vmatprep.subr.bf16.mxu0 0
      %1019 = vmatpush1.bf16.msra.mxu0 %v1000
      %1020 = vmatprep.subr.bf16.mxu0 0
      %1021 = vmatpush1.bf16.msra.mxu0 %v1001
      %1022 = vmatprep.subr.bf16.mxu0 0
      %1023 = vmatpush1.bf16.msra.mxu0 %v1002
      %1024 = vmatprep.subr.bf16.mxu0 0
      %1025 = vmatpush1.bf16.msra.mxu0 %v1003
      %1026 = vmatprep.subr.bf16.mxu0 0
      %1027 = vmatpush1.bf16.msra.mxu0 %v1004
      %1028 = vmatprep.subr.bf16.mxu0 0
      %1029 = vmatpush1.bf16.msra.mxu0 %v1005
      %1030 = vmatprep.subr.bf16.mxu0 0
      %1031 = vmatpush1.bf16.msra.mxu0 0
      %1032 = vmatprep.subr.bf16.mxu0 0
      %1033 = vmatpush1.bf16.msra.mxu0 0
      %1034 = vmatprep.subr.bf16.mxu0 0
      %1035 = vmatpush1.bf16.msra.mxu0 0
      %1036 = vmatprep.subr.bf16.mxu0 0
      %1037 = vmatpush1.bf16.msra.mxu0 0
      %1038 = vmatprep.subr.bf16.mxu0 0
      %1039 = vmatpush1.bf16.msra.mxu0 0
      %1040 = vmatprep.subr.bf16.mxu0 0
      %1041 = vmatpush1.bf16.msra.mxu0 0
      %1042 = vmatprep.subr.bf16.mxu0 0
      %1043 = vmatpush1.bf16.msra.mxu0 0
      %1044 = vmatprep.subr.bf16.mxu0 0
      %1045 = vmatpush1.bf16.msra.mxu0 0
      %1046 = vmatprep.mubr.bf16.mxu0 0
      %1047 = vmatmul.mubr.bf16.gmra.mrb[0].mxu0 %v964
      %v1048 = vpop.f32.mrb[0].mxu0
      %v1049 = vadd.f32 0.0, %v1048
      %v1050 = vpop.f32.mrb[0].mxu0
      %v1051 = vpop.f32.mrb[0].mxu0
      %v1052 = vadd.f32 0.0, %v1051
      %v1053 = vpop.f32.mrb[0].mxu0
      %1054 = vdwg.mxu0
      %v1071 = vunpack.c.l.b16 %v924
      %v1072 = vunpack.c.l.b16 %v925
      %v1073 = vunpack.c.l.b16 %v926
      %v1074 = vunpack.c.l.b16 %v927
      %v1075 = vunpack.c.l.b16 %v928
      %v1076 = vunpack.c.l.b16 %v929
      %v1077 = vunpack.c.l.b16 %v930
      %v1078 = vunpack.c.l.b16 %v931
      %v1079 = vunpack.c.l.b16 %v932
      %v1080 = vunpack.c.l.b16 %v933
      %v1081 = vunpack.c.l.b16 %v934
      %v1082 = vunpack.c.l.b16 %v935
      %v1083 = vunpack.c.l.b16 %v936
      %v1084 = vunpack.c.l.b16 %v937
      %v1085 = vunpack.c.l.b16 %v938
      %v1086 = vunpack.c.l.b16 %v939
      %v1087 = vpack.c.b16 %v1072, %v1071
      %v1088 = vpack.c.b16 %v1074, %v1073
      %v1089 = vpack.c.b16 %v1076, %v1075
      %v1090 = vpack.c.b16 %v1078, %v1077
      %v1091 = vpack.c.b16 %v1080, %v1079
      %v1092 = vpack.c.b16 %v1082, %v1081
      %v1093 = vpack.c.b16 %v1084, %v1083
      %v1094 = vpack.c.b16 %v1086, %v1085
      %1103 = vmatprep.subr.bf16.mxu0 0
      %1104 = vmatpush1.bf16.msra.mxu0 %v1087
      %1105 = vmatprep.subr.bf16.mxu0 0
      %1106 = vmatpush1.bf16.msra.mxu0 %v1088
      %1107 = vmatprep.subr.bf16.mxu0 0
      %1108 = vmatpush1.bf16.msra.mxu0 %v1089
      %1109 = vmatprep.subr.bf16.mxu0 0
      %1110 = vmatpush1.bf16.msra.mxu0 %v1090
      %1111 = vmatprep.subr.bf16.mxu0 0
      %1112 = vmatpush1.bf16.msra.mxu0 %v1091
      %1113 = vmatprep.subr.bf16.mxu0 0
      %1114 = vmatpush1.bf16.msra.mxu0 %v1092
      %1115 = vmatprep.subr.bf16.mxu0 0
      %1116 = vmatpush1.bf16.msra.mxu0 %v1093
      %1117 = vmatprep.subr.bf16.mxu0 0
      %1118 = vmatpush1.bf16.msra.mxu0 %v1094
      %1119 = vmatprep.subr.bf16.mxu0 0
      %1120 = vmatpush1.bf16.msra.mxu0 0
      %1121 = vmatprep.subr.bf16.mxu0 0
      %1122 = vmatpush1.bf16.msra.mxu0 0
      %1123 = vmatprep.subr.bf16.mxu0 0
      %1124 = vmatpush1.bf16.msra.mxu0 0
      %1125 = vmatprep.subr.bf16.mxu0 0
      %1126 = vmatpush1.bf16.msra.mxu0 0
      %1127 = vmatprep.subr.bf16.mxu0 0
      %1128 = vmatpush1.bf16.msra.mxu0 0
      %1129 = vmatprep.subr.bf16.mxu0 0
      %1130 = vmatpush1.bf16.msra.mxu0 0
      %1131 = vmatprep.subr.bf16.mxu0 0
      %1132 = vmatpush1.bf16.msra.mxu0 0
      %1133 = vmatprep.subr.bf16.mxu0 0
      %1134 = vmatpush1.bf16.msra.mxu0 0
      %1135 = vmatprep.mubr.bf16.mxu0 0
      %1136 = vmatmul.mubr.bf16.gmra.mrb[0].mxu0 %v923
      %v1137 = vpop.f32.mrb[0].mxu0
      %v1138 = vadd.f32 %v1049, %v1137
      %v1139 = vpop.f32.mrb[0].mxu0
      %v1140 = vpop.f32.mrb[0].mxu0
      %v1141 = vadd.f32 %v1052, %v1140
      %v1142 = vpop.f32.mrb[0].mxu0
      %1143 = vdwg.mxu0
      %v1144 = vld [vmem:[#allocation2] sm:$0x7e]
      %s1145 = scalar_lea.vmem %s3, 128
      %v1146 = vld [vmem:[%s1145] sm:$0xf]
      %v1147 = vld [vmem:[%s1145 + $0x4] sm:$0xf]
      %v1148 = vld [vmem:[%s1145 + $0x8] sm:$0xf]
      %v1149 = vld [vmem:[%s1145 + $0xc] sm:$0xf]
      %v1150 = vld [vmem:[%s1145 + $0x10] sm:$0xf]
      %v1151 = vld [vmem:[%s1145 + $0x14] sm:$0xf]
      %v1152 = vld [vmem:[%s1145 + $0x18] sm:$0xf]
      %v1153 = vld [vmem:[%s1145 + $0x1c] sm:$0xf]
      %v1154 = vld [vmem:[%s1145 + $0x20] sm:$0xf]
      %v1155 = vld [vmem:[%s1145 + $0x24] sm:$0xf]
      %v1156 = vld [vmem:[%s1145 + $0x28] sm:$0xf]
      %v1157 = vld [vmem:[%s1145 + $0x2c] sm:$0xf]
      %v1158 = vld [vmem:[%s1145 + $0x30] sm:$0xf]
      %v1159 = vld [vmem:[%s1145 + $0x34] sm:$0xf]
      %v1160 = vld [vmem:[%s1145 + $0x38] sm:$0xf]
      %v1161 = vld [vmem:[%s1145 + $0x3c] sm:$0xf]
      %v1163 = vrot.slane %v1144, 1
      %v1181 = vunpack.c.l.b16 %v1146
      %v1182 = vunpack.c.l.b16 %v1147
      %v1183 = vunpack.c.l.b16 %v1148
      %v1184 = vunpack.c.l.b16 %v1149
      %v1185 = vunpack.c.l.b16 %v1150
      %v1186 = vunpack.c.l.b16 %v1151
      %v1187 = vunpack.c.l.b16 %v1152
      %v1188 = vunpack.c.l.b16 %v1153
      %v1189 = vunpack.c.l.b16 %v1154
      %v1190 = vunpack.c.l.b16 %v1155
      %v1191 = vunpack.c.l.b16 %v1156
      %v1192 = vunpack.c.l.b16 %v1157
      %v1193 = vunpack.c.l.b16 %v1158
      %v1194 = vunpack.c.l.b16 %v1159
      %v1195 = vunpack.c.l.b16 %v1160
      %v1196 = vunpack.c.l.b16 %v1161
      %v1197 = vpack.c.b16 %v1182, %v1181
      %v1198 = vpack.c.b16 %v1184, %v1183
      %v1199 = vpack.c.b16 %v1186, %v1185
      %v1200 = vpack.c.b16 %v1188, %v1187
      %v1201 = vpack.c.b16 %v1190, %v1189
      %v1202 = vpack.c.b16 %v1192, %v1191
      %v1203 = vpack.c.b16 %v1194, %v1193
      %v1204 = vpack.c.b16 %v1196, %v1195
      %1213 = vmatprep.subr.bf16.mxu0 0
      %1214 = vmatpush1.bf16.msra.mxu0 %v1197
      %1215 = vmatprep.subr.bf16.mxu0 0
      %1216 = vmatpush1.bf16.msra.mxu0 %v1198
      %1217 = vmatprep.subr.bf16.mxu0 0
      %1218 = vmatpush1.bf16.msra.mxu0 %v1199
      %1219 = vmatprep.subr.bf16.mxu0 0
      %1220 = vmatpush1.bf16.msra.mxu0 %v1200
      %1221 = vmatprep.subr.bf16.mxu0 0
      %1222 = vmatpush1.bf16.msra.mxu0 %v1201
      %1223 = vmatprep.subr.bf16.mxu0 0
      %1224 = vmatpush1.bf16.msra.mxu0 %v1202
      %1225 = vmatprep.subr.bf16.mxu0 0
      %1226 = vmatpush1.bf16.msra.mxu0 %v1203
      %1227 = vmatprep.subr.bf16.mxu0 0
      %1228 = vmatpush1.bf16.msra.mxu0 %v1204
      %1229 = vmatprep.subr.bf16.mxu0 0
      %1230 = vmatpush1.bf16.msra.mxu0 0
      %1231 = vmatprep.subr.bf16.mxu0 0
      %1232 = vmatpush1.bf16.msra.mxu0 0
      %1233 = vmatprep.subr.bf16.mxu0 0
      %1234 = vmatpush1.bf16.msra.mxu0 0
      %1235 = vmatprep.subr.bf16.mxu0 0
      %1236 = vmatpush1.bf16.msra.mxu0 0
      %1237 = vmatprep.subr.bf16.mxu0 0
      %1238 = vmatpush1.bf16.msra.mxu0 0
      %1239 = vmatprep.subr.bf16.mxu0 0
      %1240 = vmatpush1.bf16.msra.mxu0 0
      %1241 = vmatprep.subr.bf16.mxu0 0
      %1242 = vmatpush1.bf16.msra.mxu0 0
      %1243 = vmatprep.subr.bf16.mxu0 0
      %1244 = vmatpush1.bf16.msra.mxu0 0
      %1245 = vmatprep.mubr.bf16.mxu0 0
      %1246 = vmatmul.mubr.bf16.gmra.mrb[0].mxu0 %v1163
      %v1247 = vpop.f32.mrb[0].mxu0
      %v1248 = vadd.f32 0.0, %v1247
      %v1249 = vpop.f32.mrb[0].mxu0
      %v1250 = vpop.f32.mrb[0].mxu0
      %v1251 = vadd.f32 0.0, %v1250
      %v1252 = vpop.f32.mrb[0].mxu0
      %1253 = vdwg.mxu0
      %v1254 = vadd.f32 %v1138, %v1248
      %v1255 = vadd.f32 %v1141, %v1251
      %v1256 = vld [vmem:[#allocation2] sm:$0xfe]
      %s1257 = scalar_lea.vmem %s3, 192
      %v1258 = vld [vmem:[%s1257] sm:$0xf]
      %v1259 = vld [vmem:[%s1257 + $0x4] sm:$0xf]
      %v1260 = vld [vmem:[%s1257 + $0x8] sm:$0xf]
      %v1261 = vld [vmem:[%s1257 + $0xc] sm:$0xf]
      %v1262 = vld [vmem:[%s1257 + $0x10] sm:$0xf]
      %v1263 = vld [vmem:[%s1257 + $0x14] sm:$0xf]
      %v1264 = vld [vmem:[%s1257 + $0x18] sm:$0xf]
      %v1265 = vld [vmem:[%s1257 + $0x1c] sm:$0xf]
      %v1266 = vld [vmem:[%s1257 + $0x20] sm:$0xf]
      %v1267 = vld [vmem:[%s1257 + $0x24] sm:$0xf]
      %v1268 = vld [vmem:[%s1257 + $0x28] sm:$0xf]
      %v1269 = vld [vmem:[%s1257 + $0x2c] sm:$0xf]
      %v1270 = vld [vmem:[%s1257 + $0x30] sm:$0xf]
      %v1271 = vld [vmem:[%s1257 + $0x34] sm:$0xf]
      %v1272 = vld [vmem:[%s1257 + $0x38] sm:$0xf]
      %v1273 = vld [vmem:[%s1257 + $0x3c] sm:$0xf]
      %v1275 = vshrl.u32 %v1256, 16
      %v1277 = vrot.slane %v1275, 1
      %v1278 = vshll.u32 %v1256, 16
      %v1280 = vrot.slane %v1278, 2
      %v1281 = vor.u32 %v1277, %v1280
      %v1299 = vunpack.c.l.b16 %v1258
      %v1300 = vunpack.c.l.b16 %v1259
      %v1301 = vunpack.c.l.b16 %v1260
      %v1302 = vunpack.c.l.b16 %v1261
      %v1303 = vunpack.c.l.b16 %v1262
      %v1304 = vunpack.c.l.b16 %v1263
      %v1305 = vunpack.c.l.b16 %v1264
      %v1306 = vunpack.c.l.b16 %v1265
      %v1307 = vunpack.c.l.b16 %v1266
      %v1308 = vunpack.c.l.b16 %v1267
      %v1309 = vunpack.c.l.b16 %v1268
      %v1310 = vunpack.c.l.b16 %v1269
      %v1311 = vunpack.c.l.b16 %v1270
      %v1312 = vunpack.c.l.b16 %v1271
      %v1313 = vunpack.c.l.b16 %v1272
      %v1314 = vunpack.c.l.b16 %v1273
      %v1315 = vpack.c.b16 %v1300, %v1299
      %v1316 = vpack.c.b16 %v1302, %v1301
      %v1317 = vpack.c.b16 %v1304, %v1303
      %v1318 = vpack.c.b16 %v1306, %v1305
      %v1319 = vpack.c.b16 %v1308, %v1307
      %v1320 = vpack.c.b16 %v1310, %v1309
      %v1321 = vpack.c.b16 %v1312, %v1311
      %v1322 = vpack.c.b16 %v1314, %v1313
      %1331 = vmatprep.subr.bf16.mxu0 0
      %1332 = vmatpush1.bf16.msra.mxu0 %v1315
      %1333 = vmatprep.subr.bf16.mxu0 0
      %1334 = vmatpush1.bf16.msra.mxu0 %v1316
      %1335 = vmatprep.subr.bf16.mxu0 0
      %1336 = vmatpush1.bf16.msra.mxu0 %v1317
      %1337 = vmatprep.subr.bf16.mxu0 0
      %1338 = vmatpush1.bf16.msra.mxu0 %v1318
      %1339 = vmatprep.subr.bf16.mxu0 0
      %1340 = vmatpush1.bf16.msra.mxu0 %v1319
      %1341 = vmatprep.subr.bf16.mxu0 0
      %1342 = vmatpush1.bf16.msra.mxu0 %v1320
      %1343 = vmatprep.subr.bf16.mxu0 0
      %1344 = vmatpush1.bf16.msra.mxu0 %v1321
      %1345 = vmatprep.subr.bf16.mxu0 0
      %1346 = vmatpush1.bf16.msra.mxu0 %v1322
      %1347 = vmatprep.subr.bf16.mxu0 0
      %1348 = vmatpush1.bf16.msra.mxu0 0
      %1349 = vmatprep.subr.bf16.mxu0 0
      %1350 = vmatpush1.bf16.msra.mxu0 0
      %1351 = vmatprep.subr.bf16.mxu0 0
      %1352 = vmatpush1.bf16.msra.mxu0 0
      %1353 = vmatprep.subr.bf16.mxu0 0
      %1354 = vmatpush1.bf16.msra.mxu0 0
      %1355 = vmatprep.subr.bf16.mxu0 0
      %1356 = vmatpush1.bf16.msra.mxu0 0
      %1357 = vmatprep.subr.bf16.mxu0 0
      %1358 = vmatpush1.bf16.msra.mxu0 0
      %1359 = vmatprep.subr.bf16.mxu0 0
      %1360 = vmatpush1.bf16.msra.mxu0 0
      %1361 = vmatprep.subr.bf16.mxu0 0
      %1362 = vmatpush1.bf16.msra.mxu0 0
      %1363 = vmatprep.mubr.bf16.mxu0 0
      %1364 = vmatmul.mubr.bf16.gmra.mrb[0].mxu0 %v1281
      %v1365 = vpop.f32.mrb[0].mxu0
      %v1366 = vadd.f32 0.0, %v1365
      %v1367 = vpop.f32.mrb[0].mxu0
      %v1368 = vpop.f32.mrb[0].mxu0
      %v1369 = vadd.f32 0.0, %v1368
      %v1370 = vpop.f32.mrb[0].mxu0
      %1371 = vdwg.mxu0
      %v1372 = vadd.f32 %v1254, %v1366
      %v1373 = vadd.f32 %v1255, %v1369
      %v1374 = vld [vmem:[#allocation2] sm:$0xfc]
      %s1375 = scalar_lea.vmem %s3, 256
      %v1376 = vld [vmem:[%s1375] sm:$0xf]
      %v1377 = vld [vmem:[%s1375 + $0x4] sm:$0xf]
      %v1378 = vld [vmem:[%s1375 + $0x8] sm:$0xf]
      %v1379 = vld [vmem:[%s1375 + $0xc] sm:$0xf]
      %v1380 = vld [vmem:[%s1375 + $0x10] sm:$0xf]
      %v1381 = vld [vmem:[%s1375 + $0x14] sm:$0xf]
      %v1382 = vld [vmem:[%s1375 + $0x18] sm:$0xf]
      %v1383 = vld [vmem:[%s1375 + $0x1c] sm:$0xf]
      %v1384 = vld [vmem:[%s1375 + $0x20] sm:$0xf]
      %v1385 = vld [vmem:[%s1375 + $0x24] sm:$0xf]
      %v1386 = vld [vmem:[%s1375 + $0x28] sm:$0xf]
      %v1387 = vld [vmem:[%s1375 + $0x2c] sm:$0xf]
      %v1388 = vld [vmem:[%s1375 + $0x30] sm:$0xf]
      %v1389 = vld [vmem:[%s1375 + $0x34] sm:$0xf]
      %v1390 = vld [vmem:[%s1375 + $0x38] sm:$0xf]
      %v1391 = vld [vmem:[%s1375 + $0x3c] sm:$0xf]
      %v1393 = vrot.slane %v1374, 2
      %v1411 = vunpack.c.l.b16 %v1376
      %v1412 = vunpack.c.l.b16 %v1377
      %v1413 = vunpack.c.l.b16 %v1378
      %v1414 = vunpack.c.l.b16 %v1379
      %v1415 = vunpack.c.l.b16 %v1380
      %v1416 = vunpack.c.l.b16 %v1381
      %v1417 = vunpack.c.l.b16 %v1382
      %v1418 = vunpack.c.l.b16 %v1383
      %v1419 = vunpack.c.l.b16 %v1384
      %v1420 = vunpack.c.l.b16 %v1385
      %v1421 = vunpack.c.l.b16 %v1386
      %v1422 = vunpack.c.l.b16 %v1387
      %v1423 = vunpack.c.l.b16 %v1388
      %v1424 = vunpack.c.l.b16 %v1389
      %v1425 = vunpack.c.l.b16 %v1390
      %v1426 = vunpack.c.l.b16 %v1391
      %v1427 = vpack.c.b16 %v1412, %v1411
      %v1428 = vpack.c.b16 %v1414, %v1413
      %v1429 = vpack.c.b16 %v1416, %v1415
      %v1430 = vpack.c.b16 %v1418, %v1417
      %v1431 = vpack.c.b16 %v1420, %v1419
      %v1432 = vpack.c.b16 %v1422, %v1421
      %v1433 = vpack.c.b16 %v1424, %v1423
      %v1434 = vpack.c.b16 %v1426, %v1425
      %1443 = vmatprep.subr.bf16.mxu0 0
      %1444 = vmatpush1.bf16.msra.mxu0 %v1427
      %1445 = vmatprep.subr.bf16.mxu0 0
      %1446 = vmatpush1.bf16.msra.mxu0 %v1428
      %1447 = vmatprep.subr.bf16.mxu0 0
      %1448 = vmatpush1.bf16.msra.mxu0 %v1429
      %1449 = vmatprep.subr.bf16.mxu0 0
      %1450 = vmatpush1.bf16.msra.mxu0 %v1430
      %1451 = vmatprep.subr.bf16.mxu0 0
      %1452 = vmatpush1.bf16.msra.mxu0 %v1431
      %1453 = vmatprep.subr.bf16.mxu0 0
      %1454 = vmatpush1.bf16.msra.mxu0 %v1432
      %1455 = vmatprep.subr.bf16.mxu0 0
      %1456 = vmatpush1.bf16.msra.mxu0 %v1433
      %1457 = vmatprep.subr.bf16.mxu0 0
      %1458 = vmatpush1.bf16.msra.mxu0 %v1434
      %1459 = vmatprep.subr.bf16.mxu0 0
      %1460 = vmatpush1.bf16.msra.mxu0 0
      %1461 = vmatprep.subr.bf16.mxu0 0
      %1462 = vmatpush1.bf16.msra.mxu0 0
      %1463 = vmatprep.subr.bf16.mxu0 0
      %1464 = vmatpush1.bf16.msra.mxu0 0
      %1465 = vmatprep.subr.bf16.mxu0 0
      %1466 = vmatpush1.bf16.msra.mxu0 0
      %1467 = vmatprep.subr.bf16.mxu0 0
      %1468 = vmatpush1.bf16.msra.mxu0 0
      %1469 = vmatprep.subr.bf16.mxu0 0
      %1470 = vmatpush1.bf16.msra.mxu0 0
      %1471 = vmatprep.subr.bf16.mxu0 0
      %1472 = vmatpush1.bf16.msra.mxu0 0
      %1473 = vmatprep.subr.bf16.mxu0 0
      %1474 = vmatpush1.bf16.msra.mxu0 0
      %1475 = vmatprep.mubr.bf16.mxu0 0
      %1476 = vmatmul.mubr.bf16.gmra.mrb[0].mxu0 %v1393
      %v1477 = vpop.f32.mrb[0].mxu0
      %v1478 = vadd.f32 0.0, %v1477
      %v1479 = vpop.f32.mrb[0].mxu0
      %v1480 = vpop.f32.mrb[0].mxu0
      %v1481 = vadd.f32 0.0, %v1480
      %v1482 = vpop.f32.mrb[0].mxu0
      %1483 = vdwg.mxu0
      %v1484 = vadd.f32 %v1372, %v1478
      %v1485 = vadd.f32 %v1373, %v1481
      %v1486 = vld [vmem:[%s4] sm:$0x1]
      %v1488 = vlaneseq
      %v1489 = vshrl.u32 %v1488, 7
      %v1490 = vsub.s32 0, %v1489
      %v1491 = vrot.slane %v1486, %v1490
      %v1493 = vadd.f32 %v1484, %v1491
      %v1494 = vadd.f32 %v1485, %v1491
      %v1495 = vpack.c.bf16 %v1494, %v1493
      %v1497 = vunpack.c.l.b16 %v1495
      %v1498 = vunpack.c.h.b16 %v1495
      %v1499 = vpack.c.b16 %v1497, %v1497
      %v1500 = vpack.c.b16 %v1498, %v1498
      %1503 = vst [vmem:[%s285] sm:$0xf] %v1499
      %1504 = vst [vmem:[%s285 + $0x4] sm:$0x3] %v1500
      %vm1505 = vcmask 1043456
      %v1506 = vsel %vm1505, %v1494, 0.0
      %v1507 = vadd.f32 %v1493, %v1506
      %v1508 = vrot.slane %v1507, 4
      %v1509 = vadd.f32 %v1507, %v1508
      %v1510 = vrot.slane %v1509, 2
      %v1511 = vadd.f32 %v1509, %v1510
      %v1512 = vrot.slane %v1511, 1
      %v1513 = vadd.f32 %v1511, %v1512
      %v1514 = vmul.f32 %v1493, %v1493
      %v1515 = vmul.f32 %v1494, %v1494
      %v1516 = vsel %vm1505, %v1515, 0.0
      %v1517 = vadd.f32 %v1514, %v1516
      %v1518 = vrot.slane %v1517, 4
      %v1519 = vadd.f32 %v1517, %v1518
      %v1520 = vrot.slane %v1519, 2
      %v1521 = vadd.f32 %v1519, %v1520
      %v1522 = vrot.slane %v1521, 1
      %v1523 = vadd.f32 %v1521, %v1522
      %v1524 = vld [vmem:[%s5] sm:$0xff]
      %v1525 = vld [vmem:[%s5 + $0x8] sm:$0xff]
      %v1526 = vld [vmem:[%s5 + $0x10] sm:$0xff]
      %v1527 = vld [vmem:[%s5 + $0x18] sm:$0xff]
      %v1528 = vld [vmem:[%s5 + $0x20] sm:$0xff]
      %v1529 = vld [vmem:[%s5 + $0x28] sm:$0xff]
      %v1530 = vld [vmem:[%s5 + $0x30] sm:$0xff]
      %v1531 = vld [vmem:[%s5 + $0x38] sm:$0xff]
      %v1532 = vld [vmem:[%s5 + $0x40] sm:$0xff]
      %v1533 = vld [vmem:[%s5 + $0x48] sm:$0xff]
      %v1534 = vld [vmem:[%s5 + $0x50] sm:$0xff]
      %v1535 = vld [vmem:[%s5 + $0x58] sm:$0xff]
      %v1536 = vld [vmem:[%s5 + $0x60] sm:$0xff]
      %v1537 = vld [vmem:[%s5 + $0x68] sm:$0xff]
      %v1538 = vld [vmem:[%s5 + $0x70] sm:$0xff]
      %v1539 = vld [vmem:[%s5 + $0x78] sm:$0xff]
      %1540 = vmatprep.subr.mxu0 0.0
      %1541 = vmatpush1.msra.mxu0 %v1524
      %1542 = vmatprep.subr.mxu0 0.0
      %1543 = vmatpush1.msra.mxu0 %v1525
      %1544 = vmatprep.subr.mxu0 0.0
      %1545 = vmatpush1.msra.mxu0 %v1526
      %1546 = vmatprep.subr.mxu0 0.0
      %1547 = vmatpush1.msra.mxu0 %v1527
      %1548 = vmatprep.subr.mxu0 0.0
      %1549 = vmatpush1.msra.mxu0 %v1528
      %1550 = vmatprep.subr.mxu0 0.0
      %1551 = vmatpush1.msra.mxu0 %v1529
      %1552 = vmatprep.subr.mxu0 0.0
      %1553 = vmatpush1.msra.mxu0 %v1530
      %1554 = vmatprep.subr.mxu0 0.0
      %1555 = vmatpush1.msra.mxu0 %v1531
      %1556 = vmatprep.subr.mxu0 0.0
      %1557 = vmatpush1.msra.mxu0 %v1532
      %1558 = vmatprep.subr.mxu0 0.0
      %1559 = vmatpush1.msra.mxu0 %v1533
      %1560 = vmatprep.subr.mxu0 0.0
      %1561 = vmatpush1.msra.mxu0 %v1534
      %1562 = vmatprep.subr.mxu0 0.0
      %1563 = vmatpush1.msra.mxu0 %v1535
      %1564 = vmatprep.subr.mxu0 0.0
      %1565 = vmatpush1.msra.mxu0 %v1536
      %1566 = vmatprep.subr.mxu0 0.0
      %1567 = vmatpush1.msra.mxu0 %v1537
      %1568 = vmatprep.subr.mxu0 0.0
      %1569 = vmatpush1.msra.mxu0 %v1538
      %1570 = vmatprep.subr.mxu0 0.0
      %1571 = vmatpush1.msra.mxu0 %v1539
      %1572 = vmatprep.subr.mxu0 0.0
      %1573 = vmatpush1.msra.mxu0 0.0
      %1574 = vmatprep.subr.mxu0 0.0
      %1575 = vmatpush1.msra.mxu0 0.0
      %1576 = vmatprep.subr.mxu0 0.0
      %1577 = vmatpush1.msra.mxu0 0.0
      %1578 = vmatprep.subr.mxu0 0.0
      %1579 = vmatpush1.msra.mxu0 0.0
      %1580 = vmatprep.subr.mxu0 0.0
      %1581 = vmatpush1.msra.mxu0 0.0
      %1582 = vmatprep.subr.mxu0 0.0
      %1583 = vmatpush1.msra.mxu0 0.0
      %1584 = vmatprep.subr.mxu0 0.0
      %1585 = vmatpush1.msra.mxu0 0.0
      %1586 = vmatprep.subr.mxu0 0.0
      %1587 = vmatpush1.msra.mxu0 0.0
      %1588 = vmatprep.subr.mxu0 0.0
      %1589 = vmatpush1.msra.mxu0 0.0
      %1590 = vmatprep.subr.mxu0 0.0
      %1591 = vmatpush1.msra.mxu0 0.0
      %1592 = vmatprep.subr.mxu0 0.0
      %1593 = vmatpush1.msra.mxu0 0.0
      %1594 = vmatprep.subr.mxu0 0.0
      %1595 = vmatpush1.msra.mxu0 0.0
      %1596 = vmatprep.subr.mxu0 0.0
      %1597 = vmatpush1.msra.mxu0 0.0
      %1598 = vmatprep.subr.mxu0 0.0
      %1599 = vmatpush1.msra.mxu0 0.0
      %1600 = vmatprep.subr.mxu0 0.0
      %1601 = vmatpush1.msra.mxu0 0.0
      %1602 = vmatprep.subr.mxu0 0.0
      %1603 = vmatpush1.msra.mxu0 0.0
      %1604 = vmatprep.mubr.f32.mxu0 0.0
      %1605 = vmatmul.mubr.f32.gmra.mrb[0].mxu0 %v1513
      %v1606 = vpop.f32.mrb[0].mxu0
      %v1607 = vadd.f32 0.0, %v1606
      %v1608 = vpop.f32.mrb[0].mxu0
      %1609 = vdwg.mxu0
      %1610 = vmatprep.subr.mxu0 0.0
      %1611 = vmatpush1.msra.mxu0 %v1524
      %1612 = vmatprep.subr.mxu0 0.0
      %1613 = vmatpush1.msra.mxu0 %v1525
      %1614 = vmatprep.subr.mxu0 0.0
      %1615 = vmatpush1.msra.mxu0 %v1526
      %1616 = vmatprep.subr.mxu0 0.0
      %1617 = vmatpush1.msra.mxu0 %v1527
      %1618 = vmatprep.subr.mxu0 0.0
      %1619 = vmatpush1.msra.mxu0 %v1528
      %1620 = vmatprep.subr.mxu0 0.0
      %1621 = vmatpush1.msra.mxu0 %v1529
      %1622 = vmatprep.subr.mxu0 0.0
      %1623 = vmatpush1.msra.mxu0 %v1530
      %1624 = vmatprep.subr.mxu0 0.0
      %1625 = vmatpush1.msra.mxu0 %v1531
      %1626 = vmatprep.subr.mxu0 0.0
      %1627 = vmatpush1.msra.mxu0 %v1532
      %1628 = vmatprep.subr.mxu0 0.0
      %1629 = vmatpush1.msra.mxu0 %v1533
      %1630 = vmatprep.subr.mxu0 0.0
      %1631 = vmatpush1.msra.mxu0 %v1534
      %1632 = vmatprep.subr.mxu0 0.0
      %1633 = vmatpush1.msra.mxu0 %v1535
      %1634 = vmatprep.subr.mxu0 0.0
      %1635 = vmatpush1.msra.mxu0 %v1536
      %1636 = vmatprep.subr.mxu0 0.0
      %1637 = vmatpush1.msra.mxu0 %v1537
      %1638 = vmatprep.subr.mxu0 0.0
      %1639 = vmatpush1.msra.mxu0 %v1538
      %1640 = vmatprep.subr.mxu0 0.0
      %1641 = vmatpush1.msra.mxu0 %v1539
      %1642 = vmatprep.subr.mxu0 0.0
      %1643 = vmatpush1.msra.mxu0 0.0
      %1644 = vmatprep.subr.mxu0 0.0
      %1645 = vmatpush1.msra.mxu0 0.0
      %1646 = vmatprep.subr.mxu0 0.0
      %1647 = vmatpush1.msra.mxu0 0.0
      %1648 = vmatprep.subr.mxu0 0.0
      %1649 = vmatpush1.msra.mxu0 0.0
      %1650 = vmatprep.subr.mxu0 0.0
      %1651 = vmatpush1.msra.mxu0 0.0
      %1652 = vmatprep.subr.mxu0 0.0
      %1653 = vmatpush1.msra.mxu0 0.0
      %1654 = vmatprep.subr.mxu0 0.0
      %1655 = vmatpush1.msra.mxu0 0.0
      %1656 = vmatprep.subr.mxu0 0.0
      %1657 = vmatpush1.msra.mxu0 0.0
      %1658 = vmatprep.subr.mxu0 0.0
      %1659 = vmatpush1.msra.mxu0 0.0
      %1660 = vmatprep.subr.mxu0 0.0
      %1661 = vmatpush1.msra.mxu0 0.0
      %1662 = vmatprep.subr.mxu0 0.0
      %1663 = vmatpush1.msra.mxu0 0.0
      %1664 = vmatprep.subr.mxu0 0.0
      %1665 = vmatpush1.msra.mxu0 0.0
      %1666 = vmatprep.subr.mxu0 0.0
      %1667 = vmatpush1.msra.mxu0 0.0
      %1668 = vmatprep.subr.mxu0 0.0
      %1669 = vmatpush1.msra.mxu0 0.0
      %1670 = vmatprep.subr.mxu0 0.0
      %1671 = vmatpush1.msra.mxu0 0.0
      %1672 = vmatprep.subr.mxu0 0.0
      %1673 = vmatpush1.msra.mxu0 0.0
      %1674 = vmatprep.mubr.f32.mxu0 0.0
      %1675 = vmatmul.mubr.f32.gmra.mrb[0].mxu0 %v1523
      %v1676 = vpop.f32.mrb[0].mxu0
      %v1677 = vadd.f32 0.0, %v1676
      %v1678 = vpop.f32.mrb[0].mxu0
      %1679 = vdwg.mxu0
      %v1681 = vrot.slane %v1677, 7
      %vm1683 = vcmask 1040384
      %v1684 = vsel %vm1683, %v1607, %v1681
      %1685 = vst [vmem:[%s289] sm:$0x3] %v1684
      %p1686 = scmp.lt.s32.totalorder %s19, 1
      %s1687 = scalar_select %p1686, %s19, 1
      %s1688 = smul.addr %s1687, 2
      %s1689 = smul.addr %s1688, 4
      %s1690 = scalar_lea.vmem %s6, %s1689
      %p1691 = scmp.lt.s32.totalorder %s19, 1
      %s1692 = scalar_select %p1691, %s19, 1
      %s1693 = smul.addr %s1692, 2
      %s1694 = scalar_lea.vmem %s7, %s1693
      // Predicated region
      $region45: #{vgg_block_forward.2} parent=43 // pred_check
        %p1695 = pneg %p168
      $region46: #{vgg_block_forward.2} parent=43 // pred_check_branch
        %1697 = sbr.rel (%p1695) target = $region48
      $region47: #{vgg_block_forward.2} parent=43 // pred_region
        _
      $region48: #{vgg_block_forward.2} parent=43 // pred_fallthru
        _
      // Predicated region
      $region49: #{vgg_block_forward.2} parent=43 // pred_check
        %p1698 = pneg %p194
      $region50: #{vgg_block_forward.2} parent=43 // pred_check_branch
        %1700 = sbr.rel (%p1698) target = $region52
      $region51: #{vgg_block_forward.2} parent=43 // pred_region
        _
      $region52: #{vgg_block_forward.2} parent=43 // pred_fallthru
        _
    $region44: #{vgg_block_forward.2} parent=5 // pred_fallthru
      _
    %p1701 = scmp.le.s32.totalorder 2, %s14
    // Predicated region
    $region53: #{vgg_block_forward.2} parent=5 // pred_check
      %p1702 = pneg %p1701
    $region54: #{vgg_block_forward.2} parent=5 // pred_check_branch
      %1704 = sbr.rel (%p1702) target = $region56
    $region55: #{vgg_block_forward.2} parent=5 // pred_region
      %s1705 = ssub.s32 %s14, 2
      // Predicated region
      $region57: #{vgg_block_forward.2} parent=55 // pred_check
        %p1706 = pneg %p174
      $region58: #{vgg_block_forward.2} parent=55 // pred_check_branch
        %1708 = sbr.rel (%p1706) target = $region60
      $region59: #{vgg_block_forward.2} parent=55 // pred_region
        %p1709 = scmp.lt.s32.totalorder %s20, 1
        %s1710 = scalar_select %p1709, %s20, 1
        %s1711 = smul.addr %s1710, 2
        %s1712 = smul.addr %s1711, 4
        %s1713 = scalar_lea.vmem %s6, %s1712
      $region60: #{vgg_block_forward.2} parent=55 // pred_fallthru
        _
      // Predicated region
      $region61: #{vgg_block_forward.2} parent=55 // pred_check
        %p1714 = pneg %p200
      $region62: #{vgg_block_forward.2} parent=55 // pred_check_branch
        %1716 = sbr.rel (%p1714) target = $region64
      $region63: #{vgg_block_forward.2} parent=55 // pred_region
        %p1717 = scmp.lt.s32.totalorder %s20, 1
        %s1718 = scalar_select %p1717, %s20, 1
        %s1719 = smul.addr %s1718, 2
        %s1720 = scalar_lea.vmem %s7, %s1719
      $region64: #{vgg_block_forward.2} parent=55 // pred_fallthru
        _
    $region56: #{vgg_block_forward.2} parent=5 // pred_fallthru
      _
  $region6: #{vgg_block_forward.2} parent=0 // loop_footer
    %s18 = sadd.s32 1, %s14
  $region7: #{vgg_block_forward.2} parent=0 // loop_footer_branch
    %13 = sbr.rel target = $region3
  $region8: #{vgg_block_forward.2} parent=0 // loop_exit
    _

// kernel: tile.38
$region0: #{tile.38}
  #allocation0 [shape = 's32[1]{0}', space=sflag, size = 0x4, scoped, tag = 'scoped memory for tile.38']
  %s0 = inlined_call_operand.vmem [shape: f32[8], index: 0, kind: input, shape index: {}]
  %s1 = inlined_call_operand.vmem [shape: f32[12,8], index: 1, kind: output, shape index: {}]
  // Predicated region
  $region2: #{tile.38} parent=0 // pred_check
    _
  $region3: #{tile.38} parent=0 // pred_check_branch
    %3 = sbr.rel (0) target = $region5
  $region4: #{tile.38} parent=0 // pred_region
    _
  $region5: #{tile.38} parent=0 // pred_fallthru
    _
  %v4 = vld [vmem:[%s0] ss:$0 sm:$0xff]
  %5 = vst [vmem:[%s1] sm:$0xff] %v4
  %s6 = scalar_lea.vmem %s1, 8
  %7 = vst [vmem:[%s6] sm:$0xff] %v4

// kernel: vgg_block_forward.3
$region0: #{vgg_block_forward.3}
  #allocation0 [shape = 'u32[]', space=smem, size = 0x4, offset = 0x4, fixed_abs, tag = 'smem constant byte address 0x4 - core index']
  #allocation1 [shape = 'u32[144,128]{1,0:T(1,128)}', space=vmem, size = 0x12000, scoped, tag = 'internal scratch']
  %s0 = inlined_call_operand.vmem [shape: bf16[2,12,128], index: 0, kind: input, shape index: {}]
  %s1 = inlined_call_operand.vmem [shape: f32[1,1,128], index: 1, kind: input, shape index: {}]
  %s2 = inlined_call_operand.vmem [shape: f32[1,1,128], index: 2, kind: input, shape index: {}]
  %s3 = inlined_call_operand.vmem [shape: f32[2,12,128], index: 3, kind: output, shape index: {}]
  %s4 = sld [smem:[#allocation0]]
  $region45: #{vgg_block_forward.3} parent=0
    _
  %s6 = ssub.s32 1, %s4
  %s7 = scalar_select 0, %s6, %s4
  loop: start=0, step=1, limit=4
  $region2: #{vgg_block_forward.3} parent=0 // loop_pre_header
    _
  $region3: #{vgg_block_forward.3} parent=0 // loop_header
    %s9 = sphi 0, %s13
    %p10 = scmp.ge.s32.totalorder %s9, 4
    %s19 = sphi 0, %s21
    %s22 = sphi 0, %s19
    %s23 = sphi 0, %s22
    %s39 = sphi 0, %s23
    %s43 = sphi 0, %s43
    %s45 = sphi 0, %s43
    %s46 = sphi 0, %s45
    %s60 = sphi 0, %s46
    %s64 = sphi 0, %s64
    %s66 = sphi 0, %s64
    %s67 = sphi 0, %s66
    %s81 = sphi 0, %s67
    %s87 = sphi 0, %s89
    %s90 = sphi 0, %s87
    %s91 = sphi 0, %s90
    %s107 = sphi 0, %s91
  $region4: #{vgg_block_forward.3} parent=0 // loop_header_branch
    %12 = sbr.rel (%p10) target = $region8
  $region5: #{vgg_block_forward.3} parent=0 // loop_body
    %s14 = ssub.s32 %s9, 1
    %s15 = ssub.s32 %s9, 2
    %s16 = sadd.s32 %s9, 1
    %s17 = ssub.s32 %s9, %s16
    %p18 = scmp.eq.s32.totalorder %s17, 0
    %s20 = sadd.s32 %s19, 1
    %s21 = scalar_select %p18, %s19, %s20
    %p24 = pneg %p18
    %p25 = scmp.eq.s32.totalorder %s9, 1
    %p26 = por %p24, %p25
    %p27 = scmp.ne.s32.totalorder %s19, %s22
    %p28 = scmp.eq.s32.totalorder %s9, 0
    %p29 = por %p27, %p28
    %p30 = scmp.ne.s32.totalorder %s19, %s22
    %p31 = scmp.eq.s32.totalorder %s14, 1
    %p32 = por %p30, %p31
    %p33 = scmp.ne.s32.totalorder %s22, %s23
    %p34 = scmp.eq.s32.totalorder %s14, 0
    %p35 = por %p33, %p34
    %p36 = scmp.ne.s32.totalorder %s22, %s23
    %p37 = scmp.eq.s32.totalorder %s15, 1
    %p38 = por %p36, %p37
    %p40 = scmp.ne.s32.totalorder %s23, %s39
    %p41 = scmp.eq.s32.totalorder %s15, 0
    %p42 = por %p40, %p41
    %s44 = sadd.s32 %s43, 1
    %p47 = scmp.eq.s32.totalorder %s9, 1
    %p48 = scmp.ne.s32.totalorder %s43, %s45
    %p49 = scmp.eq.s32.totalorder %s9, 0
    %p50 = por %p48, %p49
    %p51 = scmp.ne.s32.totalorder %s43, %s45
    %p52 = scmp.eq.s32.totalorder %s14, 1
    %p53 = por %p51, %p52
    %p54 = scmp.ne.s32.totalorder %s45, %s46
    %p55 = scmp.eq.s32.totalorder %s14, 0
    %p56 = por %p54, %p55
    %p57 = scmp.ne.s32.totalorder %s45, %s46
    %p58 = scmp.eq.s32.totalorder %s15, 1
    %p59 = por %p57, %p58
    %p61 = scmp.ne.s32.totalorder %s46, %s60
    %p62 = scmp.eq.s32.totalorder %s15, 0
    %p63 = por %p61, %p62
    %s65 = sadd.s32 %s64, 1
    %p68 = scmp.eq.s32.totalorder %s9, 1
    %p69 = scmp.ne.s32.totalorder %s64, %s66
    %p70 = scmp.eq.s32.totalorder %s9, 0
    %p71 = por %p69, %p70
    %p72 = scmp.ne.s32.totalorder %s64, %s66
    %p73 = scmp.eq.s32.totalorder %s14, 1
    %p74 = por %p72, %p73
    %p75 = scmp.ne.s32.totalorder %s66, %s67
    %p76 = scmp.eq.s32.totalorder %s14, 0
    %p77 = por %p75, %p76
    %p78 = scmp.ne.s32.totalorder %s66, %s67
    %p79 = scmp.eq.s32.totalorder %s15, 1
    %p80 = por %p78, %p79
    %p82 = scmp.ne.s32.totalorder %s67, %s81
    %p83 = scmp.eq.s32.totalorder %s15, 0
    %p84 = por %p82, %p83
    %s85 = ssub.s32 %s9, %s16
    %p86 = scmp.eq.s32.totalorder %s85, 0
    %s88 = sadd.s32 %s87, 1
    %s89 = scalar_select %p86, %s87, %s88
    %p92 = pneg %p86
    %p93 = scmp.eq.s32.totalorder %s9, 1
    %p94 = por %p92, %p93
    %p95 = scmp.ne.s32.totalorder %s87, %s90
    %p96 = scmp.eq.s32.totalorder %s9, 0
    %p97 = por %p95, %p96
    %p98 = scmp.ne.s32.totalorder %s87, %s90
    %p99 = scmp.eq.s32.totalorder %s14, 1
    %p100 = por %p98, %p99
    %p101 = scmp.ne.s32.totalorder %s90, %s91
    %p102 = scmp.eq.s32.totalorder %s14, 0
    %p103 = por %p101, %p102
    %p104 = scmp.ne.s32.totalorder %s90, %s91
    %p105 = scmp.eq.s32.totalorder %s15, 1
    %p106 = por %p104, %p105
    %p108 = scmp.ne.s32.totalorder %s91, %s107
    %p109 = scmp.eq.s32.totalorder %s15, 0
    %p110 = por %p108, %p109
    %p111 = scmp.le.s32.totalorder 1, %s9
    %p112 = scmp.lt.s32.totalorder %s9, 3
    %p113 = pnand %p111, %p112
    %p114 = pneg %p113
    // Predicated region
    $region9: #{vgg_block_forward.3} parent=5 // pred_check
      _
    $region10: #{vgg_block_forward.3} parent=5 // pred_check_branch
      %116 = sbr.rel (%p113) target = $region12
    $region11: #{vgg_block_forward.3} parent=5 // pred_region
      %s117 = ssub.s32 %s9, 1
      // Predicated region
      $region13: #{vgg_block_forward.3} parent=11 // pred_check
        %p118 = pneg %p56
      $region14: #{vgg_block_forward.3} parent=11 // pred_check_branch
        %120 = sbr.rel (%p118) target = $region16
      $region15: #{vgg_block_forward.3} parent=11 // pred_region
        _
      $region16: #{vgg_block_forward.3} parent=11 // pred_fallthru
        _
      // Predicated region
      $region17: #{vgg_block_forward.3} parent=11 // pred_check
        %p121 = pneg %p77
      $region18: #{vgg_block_forward.3} parent=11 // pred_check_branch
        %123 = sbr.rel (%p121) target = $region20
      $region19: #{vgg_block_forward.3} parent=11 // pred_region
        _
      $region20: #{vgg_block_forward.3} parent=11 // pred_fallthru
        _
    $region12: #{vgg_block_forward.3} parent=5 // pred_fallthru
      _
    %p124 = scmp.lt.s32.totalorder %s9, 2
    // Predicated region
    $region21: #{vgg_block_forward.3} parent=5 // pred_check
      %p125 = pneg %p124
    $region22: #{vgg_block_forward.3} parent=5 // pred_check_branch
      %127 = sbr.rel (%p125) target = $region24
    $region23: #{vgg_block_forward.3} parent=5 // pred_region
      // Predicated region
      $region25: #{vgg_block_forward.3} parent=23 // pred_check
        %p128 = pneg %p29
      $region26: #{vgg_block_forward.3} parent=23 // pred_check_branch
        %130 = sbr.rel (%p128) target = $region28
      $region27: #{vgg_block_forward.3} parent=23 // pred_region
        %p131 = scmp.lt.s32.totalorder %s9, 1
        %s132 = scalar_select %p131, %s9, 1
        %s133 = smul.addr %s132, 2
        %s134 = smul.addr %s133, 4
        %s135 = scalar_lea.vmem %s0, %s134
      $region28: #{vgg_block_forward.3} parent=23 // pred_fallthru
        _
    $region24: #{vgg_block_forward.3} parent=5 // pred_fallthru
      _
    %p136 = scmp.le.s32.totalorder 1, %s9
    %p137 = scmp.lt.s32.totalorder %s9, 3
    %p138 = pnand %p136, %p137
    %p139 = pneg %p138
    // Predicated region
    $region29: #{vgg_block_forward.3} parent=5 // pred_check
      _
    $region30: #{vgg_block_forward.3} parent=5 // pred_check_branch
      %141 = sbr.rel (%p138) target = $region32
    $region31: #{vgg_block_forward.3} parent=5 // pred_region
      %s142 = ssub.s32 %s9, 1
      %p143 = scmp.lt.s32.totalorder %s14, 1
      %s144 = scalar_select %p143, %s14, 1
      %s145 = smul.addr %s144, 2
      %s146 = smul.addr %s145, 4
      %s147 = scalar_lea.vmem %s0, %s146
      %p148 = pneg %p35
      %p149 = pneg %p32
      %p150 = pneg %p56
      %p151 = pneg %p53
      %p152 = pneg %p77
      %p153 = pneg %p74
      %p154 = pneg %p103
      %p155 = pneg %p100
      %p156 = scmp.lt.s32.totalorder %s14, 1
      %s157 = scalar_select %p156, %s14, 1
      %s158 = smul.addr %s157, 2
      %s159 = smul.addr %s158, 8
      %s160 = scalar_lea.vmem %s3, %s159
      %p161 = scmp.lt.s32.totalorder %s14, 1
      %s162 = scalar_select %p161, %s14, 1
      %s163 = smul.addr %s162, 2
      %s164 = smul.addr %s163, 4
      %s165 = scalar_lea.vmem %s0, %s164
      %p166 = scmp.lt.s32.totalorder %s14, 1
      %s167 = scalar_select %p166, %s14, 1
      %s168 = smul.addr %s167, 2
      %s169 = smul.addr %s168, 8
      %s170 = scalar_lea.vmem %s3, %s169
      %v171 = vld [vmem:[%s165] sm:$0xf]
      %v172 = vld [vmem:[%s165 + $0x4] sm:$0x3]
      %v173 = vunpack.c.l.bf16 %v171
      %v174 = vunpack.c.l.bf16 %v172
      %v175 = vld [vmem:[%s1] sm:$0x1]
      %v177 = vlaneseq
      %v178 = vshrl.u32 %v177, 7
      %v179 = vsub.s32 0, %v178
      %v180 = vrot.slane %v175, %v179
      %v182 = vmul.f32 %v173, %v180
      %v183 = vmul.f32 %v174, %v180
      %v184 = vld [vmem:[%s2] sm:$0x1]
      %v186 = vlaneseq
      %v187 = vshrl.u32 %v186, 7
      %v188 = vsub.s32 0, %v187
      %v189 = vrot.slane %v184, %v188
      %v191 = vadd.f32 %v182, %v189
      %v192 = vadd.f32 %v183, %v189
      %v193 = vmax.f32 %v191, 0.0
      %v194 = vmax.f32 %v192, 0.0
      %195 = vst [vmem:[%s170] sm:$0xff] %v193
      %196 = vst [vmem:[%s170 + $0x8] sm:$0xf] %v194
      %p197 = scmp.lt.s32.totalorder %s14, 1
      %s198 = scalar_select %p197, %s14, 1
      %s199 = smul.addr %s198, 2
      %s200 = smul.addr %s199, 8
      %s201 = scalar_lea.vmem %s3, %s200
      // Predicated region
      $region33: #{vgg_block_forward.3} parent=31 // pred_check
        %p202 = pneg %p100
      $region34: #{vgg_block_forward.3} parent=31 // pred_check_branch
        %204 = sbr.rel (%p202) target = $region36
      $region35: #{vgg_block_forward.3} parent=31 // pred_region
        _
      $region36: #{vgg_block_forward.3} parent=31 // pred_fallthru
        _
    $region32: #{vgg_block_forward.3} parent=5 // pred_fallthru
      _
    %p205 = scmp.le.s32.totalorder 2, %s9
    // Predicated region
    $region37: #{vgg_block_forward.3} parent=5 // pred_check
      %p206 = pneg %p205
    $region38: #{vgg_block_forward.3} parent=5 // pred_check_branch
      %208 = sbr.rel (%p206) target = $region40
    $region39: #{vgg_block_forward.3} parent=5 // pred_region
      %s209 = ssub.s32 %s9, 2
      // Predicated region
      $region41: #{vgg_block_forward.3} parent=39 // pred_check
        %p210 = pneg %p106
      $region42: #{vgg_block_forward.3} parent=39 // pred_check_branch
        %212 = sbr.rel (%p210) target = $region44
      $region43: #{vgg_block_forward.3} parent=39 // pred_region
        %p213 = scmp.lt.s32.totalorder %s15, 1
        %s214 = scalar_select %p213, %s15, 1
        %s215 = smul.addr %s214, 2
        %s216 = smul.addr %s215, 8
        %s217 = scalar_lea.vmem %s3, %s216
      $region44: #{vgg_block_forward.3} parent=39 // pred_fallthru
        _
    $region40: #{vgg_block_forward.3} parent=5 // pred_fallthru
      _
  $region6: #{vgg_block_forward.3} parent=0 // loop_footer
    %s13 = sadd.s32 1, %s9
  $region7: #{vgg_block_forward.3} parent=0 // loop_footer_branch
    %8 = sbr.rel target = $region3
  $region8: #{vgg_block_forward.3} parent=0 // loop_exit
    _

</llo_original>
